<compile_context>
chip_gen: v7x
topology: tpu7x:2x2x1
jax: 0.10.0
libtpu: 0.0.40
codegen_flags: <defaults>
</compile_context>

<pallas_src>
import jax
import jax.numpy as jnp
from jax.experimental import pallas as pl
from jax.experimental.pallas import tpu as pltpu

# ----------------------------- config (args.*) --------------------------------
N_NODES   = 16      # number of graph nodes
N_EDGES   = 32      # number of directed edges
NODE_DIM  = 32      # args.in_node_features
EDGE_DIM  = 16      # args.in_edge_features
NUM_CONVS = 2       # args.num_conv_layers
HID_GIN   = 64      # GIN MLP hidden (2 * node_dim)
HID_SCORE = 64      # ScoreNet hidden
DIR_DIM   = 3       # perturb_directions feature dim (3D directions)
LANE      = 128     # lane width for the lane-dense output slab

NUM_GRAPHS      = 16     # batch of graphs processed per forward
GRAPHS_PER_TILE = 8      # graphs per grid step
GTN             = GRAPHS_PER_TILE * N_NODES   # rows per grid block (= 128)

assert HID_GIN == HID_SCORE, "packed 64-wide weight buffer assumes equal hiddens"


# ----------------------- packed-weight buffer layout ---------------------------
def _round8(r):
    return ((r + 7) // 8) * 8


def _layout(row_counts):
    offs, off = [], 0
    for r in row_counts:
        offs.append(off)
        off += _round8(r)          # keep every weight's row offset 8-aligned
    return offs, off


# 32-lane buffer: we, be, and per-layer (w2, b2)
_rows32 = [EDGE_DIM, 1] + [r for _ in range(NUM_CONVS) for r in (HID_GIN, 1)]
_offs32, R32_TOTAL = _layout(_rows32)
O_WE, O_BE = _offs32[0], _offs32[1]
O_W2 = [_offs32[2 + 2 * l] for l in range(NUM_CONVS)]
O_B2 = [_offs32[3 + 2 * l] for l in range(NUM_CONVS)]

# 64-lane buffer: per-layer (w1, b1), then ScoreNet layer-1/2 weights
_rows64 = ([r for _ in range(NUM_CONVS) for r in (NODE_DIM, 1)]
           + [NODE_DIM, DIR_DIM, 1, 1, HID_SCORE, 1])
_offs64, R64_TOTAL = _layout(_rows64)
O_W1 = [_offs64[2 * l] for l in range(NUM_CONVS)]
O_B1 = [_offs64[2 * l + 1] for l in range(NUM_CONVS)]
O_SW1H, O_SW1D, O_SW1T, O_SB1, O_SW2, O_SB2 = _offs64[2 * NUM_CONVS:]

# 128-lane buffer: lane-dense (zero-padded) ScoreNet output layer
_offs128, R128_TOTAL = _layout([HID_SCORE, 1])
O_SW3, O_SB3 = _offs128


# ------------------------------- Pallas kernel --------------------------------
def conftree_kernel(
    A_ref,                      # [GTN, GTN] block-diagonal adjacency (bf16)
    x_ref,                      # [GTN, NODE_DIM] node features
    ea_ref,                     # [GTN, EDGE_DIM] aggregated edge attrs (B @ edge_attr)
    deg_ref,                    # [GTN, 1] in-degree (for the edge bias term)
    dirs_ref,                   # [GTN, DIR_DIM] perturb directions
    tn_ref,                     # [GTN, 1] diffusion time broadcast per node
    eps_ref,                    # SMEM [NUM_CONVS] GIN epsilon
    w32_ref, w64_ref, w128_ref,  # packed weights (VMEM)
    out_ref,                    # [GTN, LANE] lane-dense score slab
):
    f32, bf16 = jnp.float32, jnp.bfloat16

    A = A_ref[...]                          # already bf16 (0/1 counts: exact)
    h = x_ref[...]                          # f32 residual stream

    # Edge path: e_agg = (B @ edge_attr) @ We + deg * be  (one MXU push + VPU)
    we = w32_ref[O_WE:O_WE + EDGE_DIM, :].astype(bf16)
    be = w32_ref[O_BE:O_BE + 1, :]
    e_agg = jnp.dot(ea_ref[...].astype(bf16), we, preferred_element_type=f32)
    e_agg = e_agg + deg_ref[...] * be       # [GTN, NODE_DIM]

    # ---------------- GINEncoder: NUM_CONVS GIN layers ------------------------
    for l in range(NUM_CONVS):
        eps = eps_ref[l]
        w1 = w64_ref[O_W1[l]:O_W1[l] + NODE_DIM, :].astype(bf16)
        b1 = w64_ref[O_B1[l]:O_B1[l] + 1, :]
        w2 = w32_ref[O_W2[l]:O_W2[l] + HID_GIN, :].astype(bf16)
        b2 = w32_ref[O_B2[l]:O_B2[l] + 1, :]

        m = jnp.dot(A, h.astype(bf16), preferred_element_type=f32) + e_agg
        z = (1.0 + eps) * h + m
        z = jnp.dot(z.astype(bf16), w1, preferred_element_type=f32) + b1
        z = jnp.maximum(z, 0.0)                          # relu
        z = jnp.dot(z.astype(bf16), w2, preferred_element_type=f32) + b2
        h = jnp.maximum(z, 0.0) + h                      # activation + short_cut

    # ---------------- ScoreNet: MLP(concat(node_attr, dirs, t)) ---------------
    # Split-concat: only the K=NODE_DIM part uses the MXU; the K=3 directions
    # contraction and the K=1 time term run on the VPU as broadcast-MACs.
    sw1h = w64_ref[O_SW1H:O_SW1H + NODE_DIM, :].astype(bf16)
    sw1d = w64_ref[O_SW1D:O_SW1D + DIR_DIM, :]
    sw1t = w64_ref[O_SW1T:O_SW1T + 1, :]
    sb1 = w64_ref[O_SB1:O_SB1 + 1, :]
    sw2 = w64_ref[O_SW2:O_SW2 + HID_SCORE, :].astype(bf16)
    sb2 = w64_ref[O_SB2:O_SB2 + 1, :]
    sw3 = w128_ref[O_SW3:O_SW3 + HID_SCORE, :].astype(bf16)   # zero-padded to 128
    sb3 = w128_ref[O_SB3:O_SB3 + 1, :]

    s = jnp.dot(h.astype(bf16), sw1h, preferred_element_type=f32)
    dirs = dirs_ref[...]
    for k in range(DIR_DIM):
        s = s + dirs[:, k:k + 1] * sw1d[k:k + 1, :]
    s = s + tn_ref[...] * sw1t + sb1
    s = jnp.maximum(s, 0.0)
    s = jnp.dot(s.astype(bf16), sw2, preferred_element_type=f32) + sb2
    s = jnp.maximum(s, 0.0)
    score = jnp.dot(s.astype(bf16), sw3, preferred_element_type=f32) + sb3
    out_ref[...] = score.astype(out_ref.dtype)           # lane-dense [GTN, 128]


# ------------------------------- wrapper ---------------------------------------
@jax.jit
def conftree_forward(A, B, x, edge_attr, dirs, t, eps, w32, w64, w128):
    """A: [G,N,N] adjacency (dst<-src). B: [G,N,E] edge->dst incidence."""
    G = x.shape[0]
    assert G % GRAPHS_PER_TILE == 0
    num_tiles = G // GRAPHS_PER_TILE

    # plain-JAX glue: flatten graphs node-major, pre-reduce the (graph-static)
    # edge aggregation, and build a per-tile block-diagonal adjacency so the
    # kernel is pure 2-D MXU matmuls.
    ea = jnp.einsum('gne,gef->gnf', B, edge_attr).reshape(G * N_NODES, EDGE_DIM)
    deg = B.sum(axis=-1).reshape(G * N_NODES, 1)
    xf = x.reshape(G * N_NODES, NODE_DIM)
    df = dirs.reshape(G * N_NODES, DIR_DIM)
    tn = jnp.repeat(t, N_NODES).reshape(G * N_NODES, 1)

    A_t = A.reshape(num_tiles, GRAPHS_PER_TILE, N_NODES, N_NODES)
    eye = jnp.eye(GRAPHS_PER_TILE, dtype=A.dtype)
    A_bd = jnp.einsum('tgnm,gh->tgnhm', A_t, eye).reshape(num_tiles * GTN, GTN)
    A_bd = A_bd.astype(jnp.bfloat16)      # 0/1 counts: exact in bf16, half the DMA

    row = lambda w: pl.BlockSpec((GTN, w), lambda g: (g, 0))
    full = lambda a: pl.BlockSpec(a.shape, lambda g: (0, 0))   # grid-resident weights

    out = pl.pallas_call(
        conftree_kernel,
        out_shape=jax.ShapeDtypeStruct((G * N_NODES, LANE), jnp.float32),
        grid=(num_tiles,),
        in_specs=[
            pl.BlockSpec((GTN, GTN), lambda g: (g, 0)),        # block-diag adjacency
            row(NODE_DIM), row(EDGE_DIM), row(1), row(DIR_DIM), row(1),
            pl.BlockSpec(memory_space=pltpu.MemorySpace.SMEM),  # eps scalars
            full(w32), full(w64), full(w128),
        ],
        out_specs=pl.BlockSpec((GTN, LANE), lambda g: (g, 0)),
        compiler_params=pltpu.CompilerParams(
            dimension_semantics=("parallel",)),                # v7x: shard over 2 TCs
    )(A_bd, xf, ea, deg, df, tn, eps, w32, w64, w128)

    # slice the 3 real score lanes back out of the lane-dense slab
    return out[:, :DIR_DIM].reshape(G, N_NODES, DIR_DIM)


# ----------------------------- deterministic init -----------------------------
def init_params(key):
    ks = jax.random.split(key, 8)

    def w(k, shape, scale=0.1):
        return (scale * jax.random.normal(k, shape)).astype(jnp.float32)

    return {
        "we": w(ks[0], (EDGE_DIM, NODE_DIM)),
        "be": jnp.zeros((1, NODE_DIM), jnp.float32),
        "w1": w(ks[1], (NUM_CONVS, NODE_DIM, HID_GIN)),
        "b1": jnp.zeros((NUM_CONVS, 1, HID_GIN), jnp.float32),
        "w2": w(ks[2], (NUM_CONVS, HID_GIN, NODE_DIM)),
        "b2": jnp.zeros((NUM_CONVS, 1, NODE_DIM), jnp.float32),
        "sw1h": w(ks[3], (NODE_DIM, HID_SCORE)),
        "sw1d": w(ks[4], (DIR_DIM, HID_SCORE)),
        "sw1t": w(ks[5], (1, HID_SCORE)),
        "sb1": jnp.zeros((1, HID_SCORE), jnp.float32),
        "sw2": w(ks[6], (HID_SCORE, HID_SCORE)),
        "sb2": jnp.zeros((1, HID_SCORE), jnp.float32),
        "sw3": w(ks[7], (HID_SCORE, DIR_DIM)),
        "sb3": jnp.zeros((1, DIR_DIM), jnp.float32),
    }


def pack_params(p):
    """Pack the small weight tensors into 3 flat, lane-width-grouped VMEM buffers."""
    def place(buf, off, wt):
        r, c = wt.shape
        return buf.at[off:off + r, :c].set(wt)

    w32 = jnp.zeros((R32_TOTAL, NODE_DIM), jnp.float32)
    w32 = place(w32, O_WE, p["we"])
    w32 = place(w32, O_BE, p["be"])
    for l in range(NUM_CONVS):
        w32 = place(w32, O_W2[l], p["w2"][l])
        w32 = place(w32, O_B2[l], p["b2"][l])

    w64 = jnp.zeros((R64_TOTAL, HID_GIN), jnp.float32)
    for l in range(NUM_CONVS):
        w64 = place(w64, O_W1[l], p["w1"][l])
        w64 = place(w64, O_B1[l], p["b1"][l])
    w64 = place(w64, O_SW1H, p["sw1h"])
    w64 = place(w64, O_SW1D, p["sw1d"])
    w64 = place(w64, O_SW1T, p["sw1t"])
    w64 = place(w64, O_SB1, p["sb1"])
    w64 = place(w64, O_SW2, p["sw2"])
    w64 = place(w64, O_SB2, p["sb2"])

    w128 = jnp.zeros((R128_TOTAL, LANE), jnp.float32)   # zero-padded lane-dense head
    w128 = place(w128, O_SW3, p["sw3"])
    w128 = place(w128, O_SB3, p["sb3"])
    return w32, w64, w128


if __name__ == "__main__":
    key = jax.random.PRNGKey(0)
    k_x, k_e, k_src, k_dst, k_dir, k_t, k_w = jax.random.split(key, 7)

    G = NUM_GRAPHS
    # data.x, data.edge_index, data.edge_attr for a batch of G graphs
    x = jax.random.normal(k_x, (G, N_NODES, NODE_DIM), dtype=jnp.float32)
    edge_attr = jax.random.normal(k_e, (G, N_EDGES, EDGE_DIM), dtype=jnp.float32)
    src = jax.random.randint(k_src, (G, N_EDGES), 0, N_NODES)
    dst = jax.random.randint(k_dst, (G, N_EDGES), 0, N_NODES)

    # perturb of data.directions, and per-graph diffusion time t
    perturb_directions = jax.random.normal(k_dir, (G, N_NODES, DIR_DIM), dtype=jnp.float32)
    t = jax.random.uniform(k_t, (G,), dtype=jnp.float32)

    # glue: densify each graph's edge list into adjacency / incidence matrices
    gi = jnp.arange(G)[:, None]
    ei = jnp.arange(N_EDGES)[None, :]
    A = jnp.zeros((G, N_NODES, N_NODES), jnp.float32).at[gi, dst, src].add(1.0)
    B = jnp.zeros((G, N_NODES, N_EDGES), jnp.float32).at[gi, dst, ei].set(1.0)

    eps = jnp.zeros((NUM_CONVS,), jnp.float32)   # GIN epsilon per layer (SMEM)
    params = init_params(k_w)
    w32, w64, w128 = pack_params(params)

    score = conftree_forward(A, B, x, edge_attr, perturb_directions, t, eps,
                             w32, w64, w128)
    score = jax.block_until_ready(score)

    assert score.shape == (G, N_NODES, DIR_DIM)
    assert bool(jnp.all(jnp.isfinite(score)))
    print("KERNEL_OK")
</pallas_src>

<mosaic_0001>
module attributes {stable_mosaic.version = 11 : i64} {
  func.func @conftree_kernel(%arg0: i32, %arg1: memref<128x128xbf16, #tpu.memory_space<vmem>>, %arg2: memref<128x32xf32, #tpu.memory_space<vmem>>, %arg3: memref<128x16xf32, #tpu.memory_space<vmem>>, %arg4: memref<128x1xf32, #tpu.memory_space<vmem>>, %arg5: memref<128x3xf32, #tpu.memory_space<vmem>>, %arg6: memref<128x1xf32, #tpu.memory_space<vmem>>, %arg7: memref<2xf32, #tpu.memory_space<smem>>, %arg8: memref<168x32xf32, #tpu.memory_space<vmem>>, %arg9: memref<208x64xf32, #tpu.memory_space<vmem>>, %arg10: memref<72x128xf32, #tpu.memory_space<vmem>>, %arg11: memref<128x128xf32, #tpu.memory_space<vmem>>) attributes {dimension_semantics = [#tpu.dimension_semantics<parallel>], iteration_bounds = array<i64: 2>, scalar_prefetch = 0 : i64, scratch_operands = 0 : i64, tpu.core_type = #tpu.core_type<tc>, window_params = [{transform_indices = @transform_0, window_bounds = array<i64: 128, 128>}, {transform_indices = @transform_1, window_bounds = array<i64: 128, 32>}, {transform_indices = @transform_2, window_bounds = array<i64: 128, 16>}, {transform_indices = @transform_3, window_bounds = array<i64: 128, 1>}, {transform_indices = @transform_4, window_bounds = array<i64: 128, 3>}, {transform_indices = @transform_5, window_bounds = array<i64: 128, 1>}, {transform_indices = @transform_6, window_bounds = array<i64: 2>}, {pipeline_mode = #tpu.pipeline_mode<synchronous>, transform_indices = @transform_7, window_bounds = array<i64: 168, 32>}, {pipeline_mode = #tpu.pipeline_mode<synchronous>, transform_indices = @transform_8, window_bounds = array<i64: 208, 64>}, {pipeline_mode = #tpu.pipeline_mode<synchronous>, transform_indices = @transform_9, window_bounds = array<i64: 72, 128>}, {transform_indices = @transform_10, window_bounds = array<i64: 128, 128>}]} {
    %c0 = arith.constant 0 : index
    %c0_0 = arith.constant 0 : index
    %0 = vector.load %arg1[%c0, %c0_0] : memref<128x128xbf16, #tpu.memory_space<vmem>>, vector<128x128xbf16>
    %c0_1 = arith.constant 0 : index
    %c0_2 = arith.constant 0 : index
    %1 = vector.load %arg2[%c0_1, %c0_2] : memref<128x32xf32, #tpu.memory_space<vmem>>, vector<128x32xf32>
    %c0_3 = arith.constant 0 : index
    %c0_4 = arith.constant 0 : index
    %2 = vector.load %arg8[%c0_3, %c0_4] : memref<168x32xf32, #tpu.memory_space<vmem>>, vector<16x32xf32>
    %3 = arith.truncf %2 : vector<16x32xf32> to vector<16x32xbf16>
    %c16 = arith.constant 16 : index
    %c0_5 = arith.constant 0 : index
    %4 = vector.load %arg8[%c16, %c0_5] : memref<168x32xf32, #tpu.memory_space<vmem>>, vector<1x32xf32>
    %c0_6 = arith.constant 0 : index
    %c0_7 = arith.constant 0 : index
    %5 = vector.load %arg3[%c0_6, %c0_7] : memref<128x16xf32, #tpu.memory_space<vmem>>, vector<128x16xf32>
    %6 = arith.truncf %5 : vector<128x16xf32> to vector<128x16xbf16>
    %cst = arith.constant dense<0.000000e+00> : vector<128x32xf32>
    %7 = tpu.matmul %6, %3, %cst {dimension_numbers = #tpu.dot_dimension_numbers<[1], [0], [0], [1], [0, 0, 1, 1], [], []>} : vector<128x16xbf16>, vector<16x32xbf16>, vector<128x32xf32> -> vector<128x32xf32>
    %c0_8 = arith.constant 0 : index
    %c0_9 = arith.constant 0 : index
    %8 = vector.load %arg4[%c0_8, %c0_9] : memref<128x1xf32, #tpu.memory_space<vmem>>, vector<128x1xf32>
    %9 = vector.broadcast %8 : vector<128x1xf32> to vector<128x32xf32>
    %10 = vector.broadcast %4 : vector<1x32xf32> to vector<128x32xf32>
    %11 = arith.mulf %9, %10 : vector<128x32xf32>
    %12 = arith.addf %7, %11 : vector<128x32xf32>
    %c0_10 = arith.constant 0 : index
    %13 = memref.load %arg7[%c0_10] : memref<2xf32, #tpu.memory_space<smem>>
    %c0_11 = arith.constant 0 : index
    %c0_12 = arith.constant 0 : index
    %14 = vector.load %arg9[%c0_11, %c0_12] : memref<208x64xf32, #tpu.memory_space<vmem>>, vector<32x64xf32>
    %15 = arith.truncf %14 : vector<32x64xf32> to vector<32x64xbf16>
    %c32 = arith.constant 32 : index
    %c0_13 = arith.constant 0 : index
    %16 = vector.load %arg9[%c32, %c0_13] : memref<208x64xf32, #tpu.memory_space<vmem>>, vector<1x64xf32>
    %c24 = arith.constant 24 : index
    %c0_14 = arith.constant 0 : index
    %17 = vector.load %arg8[%c24, %c0_14] : memref<168x32xf32, #tpu.memory_space<vmem>>, vector<64x32xf32>
    %18 = arith.truncf %17 : vector<64x32xf32> to vector<64x32xbf16>
    %c88 = arith.constant 88 : index
    %c0_15 = arith.constant 0 : index
    %19 = vector.load %arg8[%c88, %c0_15] : memref<168x32xf32, #tpu.memory_space<vmem>>, vector<1x32xf32>
    %20 = arith.truncf %1 : vector<128x32xf32> to vector<128x32xbf16>
    %cst_16 = arith.constant dense<0.000000e+00> : vector<128x32xf32>
    %21 = tpu.matmul %0, %20, %cst_16 {dimension_numbers = #tpu.dot_dimension_numbers<[1], [0], [0], [1], [0, 0, 1, 1], [], []>} : vector<128x128xbf16>, vector<128x32xbf16>, vector<128x32xf32> -> vector<128x32xf32>
    %22 = arith.addf %21, %12 : vector<128x32xf32>
    %cst_17 = arith.constant 1.000000e+00 : f32
    %23 = arith.addf %cst_17, %13 : f32
    %24 = vector.broadcast %23 : f32 to vector<128x32xf32>
    %25 = arith.mulf %24, %1 : vector<128x32xf32>
    %26 = arith.addf %25, %22 : vector<128x32xf32>
    %27 = arith.truncf %26 : vector<128x32xf32> to vector<128x32xbf16>
    %cst_18 = arith.constant dense<0.000000e+00> : vector<128x64xf32>
    %28 = tpu.matmul %27, %15, %cst_18 {dimension_numbers = #tpu.dot_dimension_numbers<[1], [0], [0], [1], [0, 0, 1, 1], [], []>} : vector<128x32xbf16>, vector<32x64xbf16>, vector<128x64xf32> -> vector<128x64xf32>
    %29 = vector.broadcast %16 : vector<1x64xf32> to vector<128x64xf32>
    %30 = arith.addf %28, %29 : vector<128x64xf32>
    %cst_19 = arith.constant 0.000000e+00 : f32
    %31 = vector.broadcast %cst_19 : f32 to vector<128x64xf32>
    %32 = arith.maximumf %30, %31 : vector<128x64xf32>
    %33 = arith.truncf %32 : vector<128x64xf32> to vector<128x64xbf16>
    %cst_20 = arith.constant dense<0.000000e+00> : vector<128x32xf32>
    %34 = tpu.matmul %33, %18, %cst_20 {dimension_numbers = #tpu.dot_dimension_numbers<[1], [0], [0], [1], [0, 0, 1, 1], [], []>} : vector<128x64xbf16>, vector<64x32xbf16>, vector<128x32xf32> -> vector<128x32xf32>
    %35 = vector.broadcast %19 : vector<1x32xf32> to vector<128x32xf32>
    %36 = arith.addf %34, %35 : vector<128x32xf32>
    %cst_21 = arith.constant 0.000000e+00 : f32
    %37 = vector.broadcast %cst_21 : f32 to vector<128x32xf32>
    %38 = arith.maximumf %36, %37 : vector<128x32xf32>
    %39 = arith.addf %38, %1 : vector<128x32xf32>
    %c1 = arith.constant 1 : index
    %40 = memref.load %arg7[%c1] : memref<2xf32, #tpu.memory_space<smem>>
    %c40 = arith.constant 40 : index
    %c0_22 = arith.constant 0 : index
    %41 = vector.load %arg9[%c40, %c0_22] : memref<208x64xf32, #tpu.memory_space<vmem>>, vector<32x64xf32>
    %42 = arith.truncf %41 : vector<32x64xf32> to vector<32x64xbf16>
    %c72 = arith.constant 72 : index
    %c0_23 = arith.constant 0 : index
    %43 = vector.load %arg9[%c72, %c0_23] : memref<208x64xf32, #tpu.memory_space<vmem>>, vector<1x64xf32>
    %c96 = arith.constant 96 : index
    %c0_24 = arith.constant 0 : index
    %44 = vector.load %arg8[%c96, %c0_24] : memref<168x32xf32, #tpu.memory_space<vmem>>, vector<64x32xf32>
    %45 = arith.truncf %44 : vector<64x32xf32> to vector<64x32xbf16>
    %c160 = arith.constant 160 : index
    %c0_25 = arith.constant 0 : index
    %46 = vector.load %arg8[%c160, %c0_25] : memref<168x32xf32, #tpu.memory_space<vmem>>, vector<1x32xf32>
    %47 = arith.truncf %39 : vector<128x32xf32> to vector<128x32xbf16>
    %cst_26 = arith.constant dense<0.000000e+00> : vector<128x32xf32>
    %48 = tpu.matmul %0, %47, %cst_26 {dimension_numbers = #tpu.dot_dimension_numbers<[1], [0], [0], [1], [0, 0, 1, 1], [], []>} : vector<128x128xbf16>, vector<128x32xbf16>, vector<128x32xf32> -> vector<128x32xf32>
    %49 = arith.addf %48, %12 : vector<128x32xf32>
    %cst_27 = arith.constant 1.000000e+00 : f32
    %50 = arith.addf %cst_27, %40 : f32
    %51 = vector.broadcast %50 : f32 to vector<128x32xf32>
    %52 = arith.mulf %51, %39 : vector<128x32xf32>
    %53 = arith.addf %52, %49 : vector<128x32xf32>
    %54 = arith.truncf %53 : vector<128x32xf32> to vector<128x32xbf16>
    %cst_28 = arith.constant dense<0.000000e+00> : vector<128x64xf32>
    %55 = tpu.matmul %54, %42, %cst_28 {dimension_numbers = #tpu.dot_dimension_numbers<[1], [0], [0], [1], [0, 0, 1, 1], [], []>} : vector<128x32xbf16>, vector<32x64xbf16>, vector<128x64xf32> -> vector<128x64xf32>
    %56 = vector.broadcast %43 : vector<1x64xf32> to vector<128x64xf32>
    %57 = arith.addf %55, %56 : vector<128x64xf32>
    %cst_29 = arith.constant 0.000000e+00 : f32
    %58 = vector.broadcast %cst_29 : f32 to vector<128x64xf32>
    %59 = arith.maximumf %57, %58 : vector<128x64xf32>
    %60 = arith.truncf %59 : vector<128x64xf32> to vector<128x64xbf16>
    %cst_30 = arith.constant dense<0.000000e+00> : vector<128x32xf32>
    %61 = tpu.matmul %60, %45, %cst_30 {dimension_numbers = #tpu.dot_dimension_numbers<[1], [0], [0], [1], [0, 0, 1, 1], [], []>} : vector<128x64xbf16>, vector<64x32xbf16>, vector<128x32xf32> -> vector<128x32xf32>
    %62 = vector.broadcast %46 : vector<1x32xf32> to vector<128x32xf32>
    %63 = arith.addf %61, %62 : vector<128x32xf32>
    %cst_31 = arith.constant 0.000000e+00 : f32
    %64 = vector.broadcast %cst_31 : f32 to vector<128x32xf32>
    %65 = arith.maximumf %63, %64 : vector<128x32xf32>
    %66 = arith.addf %65, %39 : vector<128x32xf32>
    %c80 = arith.constant 80 : index
    %c0_32 = arith.constant 0 : index
    %67 = vector.load %arg9[%c80, %c0_32] : memref<208x64xf32, #tpu.memory_space<vmem>>, vector<32x64xf32>
    %68 = arith.truncf %67 : vector<32x64xf32> to vector<32x64xbf16>
    %c112 = arith.constant 112 : index
    %c0_33 = arith.constant 0 : index
    %69 = vector.load %arg9[%c112, %c0_33] : memref<208x64xf32, #tpu.memory_space<vmem>>, vector<3x64xf32>
    %c120 = arith.constant 120 : index
    %c0_34 = arith.constant 0 : index
    %70 = vector.load %arg9[%c120, %c0_34] : memref<208x64xf32, #tpu.memory_space<vmem>>, vector<1x64xf32>
    %c128 = arith.constant 128 : index
    %c0_35 = arith.constant 0 : index
    %71 = vector.load %arg9[%c128, %c0_35] : memref<208x64xf32, #tpu.memory_space<vmem>>, vector<1x64xf32>
    %c136 = arith.constant 136 : index
    %c0_36 = arith.constant 0 : index
    %72 = vector.load %arg9[%c136, %c0_36] : memref<208x64xf32, #tpu.memory_space<vmem>>, vector<64x64xf32>
    %73 = arith.truncf %72 : vector<64x64xf32> to vector<64x64xbf16>
    %c200 = arith.constant 200 : index
    %c0_37 = arith.constant 0 : index
    %74 = vector.load %arg9[%c200, %c0_37] : memref<208x64xf32, #tpu.memory_space<vmem>>, vector<1x64xf32>
    %c0_38 = arith.constant 0 : index
    %c0_39 = arith.constant 0 : index
    %75 = vector.load %arg10[%c0_38, %c0_39] : memref<72x128xf32, #tpu.memory_space<vmem>>, vector<64x128xf32>
    %76 = arith.truncf %75 : vector<64x128xf32> to vector<64x128xbf16>
    %c64 = arith.constant 64 : index
    %c0_40 = arith.constant 0 : index
    %77 = vector.load %arg10[%c64, %c0_40] : memref<72x128xf32, #tpu.memory_space<vmem>>, vector<1x128xf32>
    %78 = arith.truncf %66 : vector<128x32xf32> to vector<128x32xbf16>
    %cst_41 = arith.constant dense<0.000000e+00> : vector<128x64xf32>
    %79 = tpu.matmul %78, %68, %cst_41 {dimension_numbers = #tpu.dot_dimension_numbers<[1], [0], [0], [1], [0, 0, 1, 1], [], []>} : vector<128x32xbf16>, vector<32x64xbf16>, vector<128x64xf32> -> vector<128x64xf32>
    %c0_42 = arith.constant 0 : index
    %c0_43 = arith.constant 0 : index
    %80 = vector.load %arg5[%c0_42, %c0_43] : memref<128x3xf32, #tpu.memory_space<vmem>>, vector<128x3xf32>
    %81 = vector.extract_strided_slice %80 {offsets = [0, 0], sizes = [128, 1], strides = [1, 1]} : vector<128x3xf32> to vector<128x1xf32>
    %82 = vector.extract_strided_slice %69 {offsets = [0, 0], sizes = [1, 64], strides = [1, 1]} : vector<3x64xf32> to vector<1x64xf32>
    %83 = vector.broadcast %81 : vector<128x1xf32> to vector<128x64xf32>
    %84 = vector.broadcast %82 : vector<1x64xf32> to vector<128x64xf32>
    %85 = arith.mulf %83, %84 : vector<128x64xf32>
    %86 = arith.addf %79, %85 : vector<128x64xf32>
    %87 = vector.extract_strided_slice %80 {offsets = [0, 1], sizes = [128, 1], strides = [1, 1]} : vector<128x3xf32> to vector<128x1xf32>
    %88 = vector.extract_strided_slice %69 {offsets = [1, 0], sizes = [1, 64], strides = [1, 1]} : vector<3x64xf32> to vector<1x64xf32>
    %89 = vector.broadcast %87 : vector<128x1xf32> to vector<128x64xf32>
    %90 = vector.broadcast %88 : vector<1x64xf32> to vector<128x64xf32>
    %91 = arith.mulf %89, %90 : vector<128x64xf32>
    %92 = arith.addf %86, %91 : vector<128x64xf32>
    %93 = vector.extract_strided_slice %80 {offsets = [0, 2], sizes = [128, 1], strides = [1, 1]} : vector<128x3xf32> to vector<128x1xf32>
    %94 = vector.extract_strided_slice %69 {offsets = [2, 0], sizes = [1, 64], strides = [1, 1]} : vector<3x64xf32> to vector<1x64xf32>
    %95 = vector.broadcast %93 : vector<128x1xf32> to vector<128x64xf32>
    %96 = vector.broadcast %94 : vector<1x64xf32> to vector<128x64xf32>
    %97 = arith.mulf %95, %96 : vector<128x64xf32>
    %98 = arith.addf %92, %97 : vector<128x64xf32>
    %c0_44 = arith.constant 0 : index
    %c0_45 = arith.constant 0 : index
    %99 = vector.load %arg6[%c0_44, %c0_45] : memref<128x1xf32, #tpu.memory_space<vmem>>, vector<128x1xf32>
    %100 = vector.broadcast %99 : vector<128x1xf32> to vector<128x64xf32>
    %101 = vector.broadcast %70 : vector<1x64xf32> to vector<128x64xf32>
    %102 = arith.mulf %100, %101 : vector<128x64xf32>
    %103 = arith.addf %98, %102 : vector<128x64xf32>
    %104 = vector.broadcast %71 : vector<1x64xf32> to vector<128x64xf32>
    %105 = arith.addf %103, %104 : vector<128x64xf32>
    %cst_46 = arith.constant 0.000000e+00 : f32
    %106 = vector.broadcast %cst_46 : f32 to vector<128x64xf32>
    %107 = arith.maximumf %105, %106 : vector<128x64xf32>
    %108 = arith.truncf %107 : vector<128x64xf32> to vector<128x64xbf16>
    %cst_47 = arith.constant dense<0.000000e+00> : vector<128x64xf32>
    %109 = tpu.matmul %108, %73, %cst_47 {dimension_numbers = #tpu.dot_dimension_numbers<[1], [0], [0], [1], [0, 0, 1, 1], [], []>} : vector<128x64xbf16>, vector<64x64xbf16>, vector<128x64xf32> -> vector<128x64xf32>
    %110 = vector.broadcast %74 : vector<1x64xf32> to vector<128x64xf32>
    %111 = arith.addf %109, %110 : vector<128x64xf32>
    %cst_48 = arith.constant 0.000000e+00 : f32
    %112 = vector.broadcast %cst_48 : f32 to vector<128x64xf32>
    %113 = arith.maximumf %111, %112 : vector<128x64xf32>
    %114 = arith.truncf %113 : vector<128x64xf32> to vector<128x64xbf16>
    %cst_49 = arith.constant dense<0.000000e+00> : vector<128x128xf32>
    %115 = tpu.matmul %114, %76, %cst_49 {dimension_numbers = #tpu.dot_dimension_numbers<[1], [0], [0], [1], [0, 0, 1, 1], [], []>} : vector<128x64xbf16>, vector<64x128xbf16>, vector<128x128xf32> -> vector<128x128xf32>
    %116 = vector.broadcast %77 : vector<1x128xf32> to vector<128x128xf32>
    %117 = arith.addf %115, %116 : vector<128x128xf32>
    %c0_50 = arith.constant 0 : index
    %c0_51 = arith.constant 0 : index
    %118 = vector.load %arg11[%c0_50, %c0_51] : memref<128x128xf32, #tpu.memory_space<vmem>>, vector<128x128xf32>
    tpu.vector_store %arg11[%c0_50, %c0_51], %117 {strides = array<i32>} : memref<128x128xf32, #tpu.memory_space<vmem>>, vector<128x128xf32>,
    return
  }
  func.func @transform_0(%arg0: i32) -> (i32, i32) {
    %c0_i32 = arith.constant 0 : i32
    %c0_i32_0 = arith.constant 0 : i32
    return %arg0, %c0_i32 : i32, i32
  }
  func.func @transform_1(%arg0: i32) -> (i32, i32) {
    %c0_i32 = arith.constant 0 : i32
    %c0_i32_0 = arith.constant 0 : i32
    return %arg0, %c0_i32 : i32, i32
  }
  func.func @transform_2(%arg0: i32) -> (i32, i32) {
    %c0_i32 = arith.constant 0 : i32
    %c0_i32_0 = arith.constant 0 : i32
    return %arg0, %c0_i32 : i32, i32
  }
  func.func @transform_3(%arg0: i32) -> (i32, i32) {
    %c0_i32 = arith.constant 0 : i32
    %c0_i32_0 = arith.constant 0 : i32
    return %arg0, %c0_i32 : i32, i32
  }
  func.func @transform_4(%arg0: i32) -> (i32, i32) {
    %c0_i32 = arith.constant 0 : i32
    %c0_i32_0 = arith.constant 0 : i32
    return %arg0, %c0_i32 : i32, i32
  }
  func.func @transform_5(%arg0: i32) -> (i32, i32) {
    %c0_i32 = arith.constant 0 : i32
    %c0_i32_0 = arith.constant 0 : i32
    return %arg0, %c0_i32 : i32, i32
  }
  func.func @transform_6(%arg0: i32) -> i32 {
    %c0_i32 = arith.constant 0 : i32
    %c0_i32_0 = arith.constant 0 : i32
    return %c0_i32 : i32
  }
  func.func @transform_7(%arg0: i32) -> (i32, i32) {
    %c0_i32 = arith.constant 0 : i32
    %c0_i32_0 = arith.constant 0 : i32
    %c0_i32_1 = arith.constant 0 : i32
    return %c0_i32, %c0_i32_0 : i32, i32
  }
  func.func @transform_8(%arg0: i32) -> (i32, i32) {
    %c0_i32 = arith.constant 0 : i32
    %c0_i32_0 = arith.constant 0 : i32
    %c0_i32_1 = arith.constant 0 : i32
    return %c0_i32, %c0_i32_0 : i32, i32
  }
  func.func @transform_9(%arg0: i32) -> (i32, i32) {
    %c0_i32 = arith.constant 0 : i32
    %c0_i32_0 = arith.constant 0 : i32
    %c0_i32_1 = arith.constant 0 : i32
    return %c0_i32, %c0_i32_0 : i32, i32
  }
  func.func @transform_10(%arg0: i32) -> (i32, i32) {
    %c0_i32 = arith.constant 0 : i32
    %c0_i32_0 = arith.constant 0 : i32
    return %arg0, %c0_i32 : i32, i32
  }
}

</mosaic_0001>

<llo_original>
// kernel: conftree_forward.1
$region0: #{conftree_forward.1}
  #allocation0 [shape = 'u32[]', space=smem, size = 0x4, offset = 0x4, fixed_abs, tag = 'smem constant byte address 0x4 - core index']
  #allocation1 [shape = 'u32[144,128]{1,0:T(1,128)}', space=vmem, size = 0x12000, scoped, tag = 'internal scratch']
  %s0 = inlined_call_operand.vmem [shape: bf16[256,128], index: 0, kind: input, shape index: {}]
  %s1 = inlined_call_operand.vmem [shape: f32[256,32], index: 1, kind: input, shape index: {}]
  %s2 = inlined_call_operand.vmem [shape: f32[256,16], index: 2, kind: input, shape index: {}]
  %s3 = inlined_call_operand.vmem [shape: f32[256,1], index: 3, kind: input, shape index: {}]
  %s4 = inlined_call_operand.vmem [shape: f32[256,3], index: 4, kind: input, shape index: {}]
  %s5 = inlined_call_operand.vmem [shape: f32[256,1], index: 5, kind: input, shape index: {}]
  %s6 = inlined_call_operand.vmem [shape: f32[2], index: 6, kind: input, shape index: {}]
  %s7 = inlined_call_operand.vmem [shape: f32[168,32], index: 7, kind: input, shape index: {}]
  %s8 = inlined_call_operand.vmem [shape: f32[208,64], index: 8, kind: input, shape index: {}]
  %s9 = inlined_call_operand.vmem [shape: f32[72,128], index: 9, kind: input, shape index: {}]
  %s10 = inlined_call_operand.vmem [shape: f32[256,128], index: 10, kind: output, shape index: {}]
  %s11 = sld [smem:[#allocation0]]
  $region77: #{conftree_forward.1} parent=0
    _
  %s13 = ssub.s32 1, %s11
  %s14 = scalar_select 0, %s13, %s11
  $region1: #{conftree_forward.1} parent=0
    #allocation2 [shape = 'u8[512]{0}', space=smem, size = 0x200, scoped, tag = 'input window, operand 6, single buffered']
    #allocation3 [shape = 's32[2]{0}', space=sflag, size = 0x8, scoped, tag = 'scoped memory for conftree_forward.1']
    %15 = vsyncpa [#allocation3], 0
    loop: start=0, step=1, limit=4
    $region2: #{conftree_forward.1} parent=1 // loop_pre_header
      _
    $region3: #{conftree_forward.1} parent=1 // loop_header
      %s17 = sphi 0, %s21
      %p18 = scmp.ge.s32.totalorder %s17, 4
      %s27 = sphi 0, %s29
      %s30 = sphi 0, %s27
      %s31 = sphi 0, %s30
      %s47 = sphi 0, %s31
      %s53 = sphi 0, %s55
      %s56 = sphi 0, %s53
      %s57 = sphi 0, %s56
      %s73 = sphi 0, %s57
      %s79 = sphi 0, %s81
      %s82 = sphi 0, %s79
      %s83 = sphi 0, %s82
      %s99 = sphi 0, %s83
      %s105 = sphi 0, %s107
      %s108 = sphi 0, %s105
      %s109 = sphi 0, %s108
      %s125 = sphi 0, %s109
      %s131 = sphi 0, %s133
      %s134 = sphi 0, %s131
      %s135 = sphi 0, %s134
      %s151 = sphi 0, %s135
      %s157 = sphi 0, %s159
      %s160 = sphi 0, %s157
      %s161 = sphi 0, %s160
      %s177 = sphi 0, %s161
      %s181 = sphi 0, %s181
      %s183 = sphi 0, %s181
      %s184 = sphi 0, %s183
      %s198 = sphi 0, %s184
      %s202 = sphi 0, %s202
      %s204 = sphi 0, %s202
      %s205 = sphi 0, %s204
      %s219 = sphi 0, %s205
      %s223 = sphi 0, %s223
      %s225 = sphi 0, %s223
      %s226 = sphi 0, %s225
      %s240 = sphi 0, %s226
      %s244 = sphi 0, %s244
      %s246 = sphi 0, %s244
      %s247 = sphi 0, %s246
      %s261 = sphi 0, %s247
      %s267 = sphi 0, %s269
      %s270 = sphi 0, %s267
      %s271 = sphi 0, %s270
      %s287 = sphi 0, %s271
    $region4: #{conftree_forward.1} parent=1 // loop_header_branch
      %20 = sbr.rel (%p18) target = $region8
    $region5: #{conftree_forward.1} parent=1 // loop_body
      %s22 = ssub.s32 %s17, 1
      %s23 = ssub.s32 %s17, 2
      %s24 = sadd.s32 %s17, 1
      %s25 = ssub.s32 %s17, %s24
      %p26 = scmp.eq.s32.totalorder %s25, 0
      %s28 = sadd.s32 %s27, 1
      %s29 = scalar_select %p26, %s27, %s28
      %p32 = pneg %p26
      %p33 = scmp.eq.s32.totalorder %s17, 1
      %p34 = por %p32, %p33
      %p35 = scmp.ne.s32.totalorder %s27, %s30
      %p36 = scmp.eq.s32.totalorder %s17, 0
      %p37 = por %p35, %p36
      %p38 = scmp.ne.s32.totalorder %s27, %s30
      %p39 = scmp.eq.s32.totalorder %s22, 1
      %p40 = por %p38, %p39
      %p41 = scmp.ne.s32.totalorder %s30, %s31
      %p42 = scmp.eq.s32.totalorder %s22, 0
      %p43 = por %p41, %p42
      %p44 = scmp.ne.s32.totalorder %s30, %s31
      %p45 = scmp.eq.s32.totalorder %s23, 1
      %p46 = por %p44, %p45
      %p48 = scmp.ne.s32.totalorder %s31, %s47
      %p49 = scmp.eq.s32.totalorder %s23, 0
      %p50 = por %p48, %p49
      %s51 = ssub.s32 %s17, %s24
      %p52 = scmp.eq.s32.totalorder %s51, 0
      %s54 = sadd.s32 %s53, 1
      %s55 = scalar_select %p52, %s53, %s54
      %p58 = pneg %p52
      %p59 = scmp.eq.s32.totalorder %s17, 1
      %p60 = por %p58, %p59
      %p61 = scmp.ne.s32.totalorder %s53, %s56
      %p62 = scmp.eq.s32.totalorder %s17, 0
      %p63 = por %p61, %p62
      %p64 = scmp.ne.s32.totalorder %s53, %s56
      %p65 = scmp.eq.s32.totalorder %s22, 1
      %p66 = por %p64, %p65
      %p67 = scmp.ne.s32.totalorder %s56, %s57
      %p68 = scmp.eq.s32.totalorder %s22, 0
      %p69 = por %p67, %p68
      %p70 = scmp.ne.s32.totalorder %s56, %s57
      %p71 = scmp.eq.s32.totalorder %s23, 1
      %p72 = por %p70, %p71
      %p74 = scmp.ne.s32.totalorder %s57, %s73
      %p75 = scmp.eq.s32.totalorder %s23, 0
      %p76 = por %p74, %p75
      %s77 = ssub.s32 %s17, %s24
      %p78 = scmp.eq.s32.totalorder %s77, 0
      %s80 = sadd.s32 %s79, 1
      %s81 = scalar_select %p78, %s79, %s80
      %p84 = pneg %p78
      %p85 = scmp.eq.s32.totalorder %s17, 1
      %p86 = por %p84, %p85
      %p87 = scmp.ne.s32.totalorder %s79, %s82
      %p88 = scmp.eq.s32.totalorder %s17, 0
      %p89 = por %p87, %p88
      %p90 = scmp.ne.s32.totalorder %s79, %s82
      %p91 = scmp.eq.s32.totalorder %s22, 1
      %p92 = por %p90, %p91
      %p93 = scmp.ne.s32.totalorder %s82, %s83
      %p94 = scmp.eq.s32.totalorder %s22, 0
      %p95 = por %p93, %p94
      %p96 = scmp.ne.s32.totalorder %s82, %s83
      %p97 = scmp.eq.s32.totalorder %s23, 1
      %p98 = por %p96, %p97
      %p100 = scmp.ne.s32.totalorder %s83, %s99
      %p101 = scmp.eq.s32.totalorder %s23, 0
      %p102 = por %p100, %p101
      %s103 = ssub.s32 %s17, %s24
      %p104 = scmp.eq.s32.totalorder %s103, 0
      %s106 = sadd.s32 %s105, 1
      %s107 = scalar_select %p104, %s105, %s106
      %p110 = pneg %p104
      %p111 = scmp.eq.s32.totalorder %s17, 1
      %p112 = por %p110, %p111
      %p113 = scmp.ne.s32.totalorder %s105, %s108
      %p114 = scmp.eq.s32.totalorder %s17, 0
      %p115 = por %p113, %p114
      %p116 = scmp.ne.s32.totalorder %s105, %s108
      %p117 = scmp.eq.s32.totalorder %s22, 1
      %p118 = por %p116, %p117
      %p119 = scmp.ne.s32.totalorder %s108, %s109
      %p120 = scmp.eq.s32.totalorder %s22, 0
      %p121 = por %p119, %p120
      %p122 = scmp.ne.s32.totalorder %s108, %s109
      %p123 = scmp.eq.s32.totalorder %s23, 1
      %p124 = por %p122, %p123
      %p126 = scmp.ne.s32.totalorder %s109, %s125
      %p127 = scmp.eq.s32.totalorder %s23, 0
      %p128 = por %p126, %p127
      %s129 = ssub.s32 %s17, %s24
      %p130 = scmp.eq.s32.totalorder %s129, 0
      %s132 = sadd.s32 %s131, 1
      %s133 = scalar_select %p130, %s131, %s132
      %p136 = pneg %p130
      %p137 = scmp.eq.s32.totalorder %s17, 1
      %p138 = por %p136, %p137
      %p139 = scmp.ne.s32.totalorder %s131, %s134
      %p140 = scmp.eq.s32.totalorder %s17, 0
      %p141 = por %p139, %p140
      %p142 = scmp.ne.s32.totalorder %s131, %s134
      %p143 = scmp.eq.s32.totalorder %s22, 1
      %p144 = por %p142, %p143
      %p145 = scmp.ne.s32.totalorder %s134, %s135
      %p146 = scmp.eq.s32.totalorder %s22, 0
      %p147 = por %p145, %p146
      %p148 = scmp.ne.s32.totalorder %s134, %s135
      %p149 = scmp.eq.s32.totalorder %s23, 1
      %p150 = por %p148, %p149
      %p152 = scmp.ne.s32.totalorder %s135, %s151
      %p153 = scmp.eq.s32.totalorder %s23, 0
      %p154 = por %p152, %p153
      %s155 = ssub.s32 %s17, %s24
      %p156 = scmp.eq.s32.totalorder %s155, 0
      %s158 = sadd.s32 %s157, 1
      %s159 = scalar_select %p156, %s157, %s158
      %p162 = pneg %p156
      %p163 = scmp.eq.s32.totalorder %s17, 1
      %p164 = por %p162, %p163
      %p165 = scmp.ne.s32.totalorder %s157, %s160
      %p166 = scmp.eq.s32.totalorder %s17, 0
      %p167 = por %p165, %p166
      %p168 = scmp.ne.s32.totalorder %s157, %s160
      %p169 = scmp.eq.s32.totalorder %s22, 1
      %p170 = por %p168, %p169
      %p171 = scmp.ne.s32.totalorder %s160, %s161
      %p172 = scmp.eq.s32.totalorder %s22, 0
      %p173 = por %p171, %p172
      %p174 = scmp.ne.s32.totalorder %s160, %s161
      %p175 = scmp.eq.s32.totalorder %s23, 1
      %p176 = por %p174, %p175
      %p178 = scmp.ne.s32.totalorder %s161, %s177
      %p179 = scmp.eq.s32.totalorder %s23, 0
      %p180 = por %p178, %p179
      %s182 = sadd.s32 %s181, 1
      %p185 = scmp.eq.s32.totalorder %s17, 1
      %p186 = scmp.ne.s32.totalorder %s181, %s183
      %p187 = scmp.eq.s32.totalorder %s17, 0
      %p188 = por %p186, %p187
      %p189 = scmp.ne.s32.totalorder %s181, %s183
      %p190 = scmp.eq.s32.totalorder %s22, 1
      %p191 = por %p189, %p190
      %p192 = scmp.ne.s32.totalorder %s183, %s184
      %p193 = scmp.eq.s32.totalorder %s22, 0
      %p194 = por %p192, %p193
      %p195 = scmp.ne.s32.totalorder %s183, %s184
      %p196 = scmp.eq.s32.totalorder %s23, 1
      %p197 = por %p195, %p196
      %p199 = scmp.ne.s32.totalorder %s184, %s198
      %p200 = scmp.eq.s32.totalorder %s23, 0
      %p201 = por %p199, %p200
      %s203 = sadd.s32 %s202, 1
      %p206 = scmp.eq.s32.totalorder %s17, 1
      %p207 = scmp.ne.s32.totalorder %s202, %s204
      %p208 = scmp.eq.s32.totalorder %s17, 0
      %p209 = por %p207, %p208
      %p210 = scmp.ne.s32.totalorder %s202, %s204
      %p211 = scmp.eq.s32.totalorder %s22, 1
      %p212 = por %p210, %p211
      %p213 = scmp.ne.s32.totalorder %s204, %s205
      %p214 = scmp.eq.s32.totalorder %s22, 0
      %p215 = por %p213, %p214
      %p216 = scmp.ne.s32.totalorder %s204, %s205
      %p217 = scmp.eq.s32.totalorder %s23, 1
      %p218 = por %p216, %p217
      %p220 = scmp.ne.s32.totalorder %s205, %s219
      %p221 = scmp.eq.s32.totalorder %s23, 0
      %p222 = por %p220, %p221
      %s224 = sadd.s32 %s223, 1
      %p227 = scmp.eq.s32.totalorder %s17, 1
      %p228 = scmp.ne.s32.totalorder %s223, %s225
      %p229 = scmp.eq.s32.totalorder %s17, 0
      %p230 = por %p228, %p229
      %p231 = scmp.ne.s32.totalorder %s223, %s225
      %p232 = scmp.eq.s32.totalorder %s22, 1
      %p233 = por %p231, %p232
      %p234 = scmp.ne.s32.totalorder %s225, %s226
      %p235 = scmp.eq.s32.totalorder %s22, 0
      %p236 = por %p234, %p235
      %p237 = scmp.ne.s32.totalorder %s225, %s226
      %p238 = scmp.eq.s32.totalorder %s23, 1
      %p239 = por %p237, %p238
      %p241 = scmp.ne.s32.totalorder %s226, %s240
      %p242 = scmp.eq.s32.totalorder %s23, 0
      %p243 = por %p241, %p242
      %s245 = sadd.s32 %s244, 1
      %p248 = scmp.eq.s32.totalorder %s17, 1
      %p249 = scmp.ne.s32.totalorder %s244, %s246
      %p250 = scmp.eq.s32.totalorder %s17, 0
      %p251 = por %p249, %p250
      %p252 = scmp.ne.s32.totalorder %s244, %s246
      %p253 = scmp.eq.s32.totalorder %s22, 1
      %p254 = por %p252, %p253
      %p255 = scmp.ne.s32.totalorder %s246, %s247
      %p256 = scmp.eq.s32.totalorder %s22, 0
      %p257 = por %p255, %p256
      %p258 = scmp.ne.s32.totalorder %s246, %s247
      %p259 = scmp.eq.s32.totalorder %s23, 1
      %p260 = por %p258, %p259
      %p262 = scmp.ne.s32.totalorder %s247, %s261
      %p263 = scmp.eq.s32.totalorder %s23, 0
      %p264 = por %p262, %p263
      %s265 = ssub.s32 %s17, %s24
      %p266 = scmp.eq.s32.totalorder %s265, 0
      %s268 = sadd.s32 %s267, 1
      %s269 = scalar_select %p266, %s267, %s268
      %p272 = pneg %p266
      %p273 = scmp.eq.s32.totalorder %s17, 1
      %p274 = por %p272, %p273
      %p275 = scmp.ne.s32.totalorder %s267, %s270
      %p276 = scmp.eq.s32.totalorder %s17, 0
      %p277 = por %p275, %p276
      %p278 = scmp.ne.s32.totalorder %s267, %s270
      %p279 = scmp.eq.s32.totalorder %s22, 1
      %p280 = por %p278, %p279
      %p281 = scmp.ne.s32.totalorder %s270, %s271
      %p282 = scmp.eq.s32.totalorder %s22, 0
      %p283 = por %p281, %p282
      %p284 = scmp.ne.s32.totalorder %s270, %s271
      %p285 = scmp.eq.s32.totalorder %s23, 1
      %p286 = por %p284, %p285
      %p288 = scmp.ne.s32.totalorder %s271, %s287
      %p289 = scmp.eq.s32.totalorder %s23, 0
      %p290 = por %p288, %p289
      %p291 = scmp.le.s32.totalorder 1, %s17
      %p292 = scmp.lt.s32.totalorder %s17, 3
      %p293 = pnand %p291, %p292
      %p294 = pneg %p293
      // Predicated region
      $region9: #{conftree_forward.1} parent=5 // pred_check
        _
      $region10: #{conftree_forward.1} parent=5 // pred_check_branch
        %296 = sbr.rel (%p293) target = $region12
      $region11: #{conftree_forward.1} parent=5 // pred_region
        %s297 = ssub.s32 %s17, 1
        // Predicated region
        $region13: #{conftree_forward.1} parent=11 // pred_check
          %p298 = pneg %p194
        $region14: #{conftree_forward.1} parent=11 // pred_check_branch
          %300 = sbr.rel (%p298) target = $region16
        $region15: #{conftree_forward.1} parent=11 // pred_region
          %s302 = ssub.s32 16, 16
          %303 = vsyncadd [#allocation3], %s302
          %s305 = sshll.u32 %s6, 4
          %s306 = int_to_ptr.vmem [resolvable:$true] %s305
          %308 = dma.vmem_to_smem %s306, 16, [#allocation2], [#allocation3]
        $region16: #{conftree_forward.1} parent=11 // pred_fallthru
          _
        // Predicated region
        $region17: #{conftree_forward.1} parent=11 // pred_check
          %p309 = pneg %p215
        $region18: #{conftree_forward.1} parent=11 // pred_check_branch
          %311 = sbr.rel (%p309) target = $region20
        $region19: #{conftree_forward.1} parent=11 // pred_region
          _
        $region20: #{conftree_forward.1} parent=11 // pred_fallthru
          _
        // Predicated region
        $region21: #{conftree_forward.1} parent=11 // pred_check
          %p312 = pneg %p236
        $region22: #{conftree_forward.1} parent=11 // pred_check_branch
          %314 = sbr.rel (%p312) target = $region24
        $region23: #{conftree_forward.1} parent=11 // pred_region
          _
        $region24: #{conftree_forward.1} parent=11 // pred_fallthru
          _
        // Predicated region
        $region25: #{conftree_forward.1} parent=11 // pred_check
          %p315 = pneg %p257
        $region26: #{conftree_forward.1} parent=11 // pred_check_branch
          %317 = sbr.rel (%p315) target = $region28
        $region27: #{conftree_forward.1} parent=11 // pred_region
          _
        $region28: #{conftree_forward.1} parent=11 // pred_fallthru
          _
      $region12: #{conftree_forward.1} parent=5 // pred_fallthru
        _
      %p318 = scmp.lt.s32.totalorder %s17, 2
      // Predicated region
      $region29: #{conftree_forward.1} parent=5 // pred_check
        %p319 = pneg %p318
      $region30: #{conftree_forward.1} parent=5 // pred_check_branch
        %321 = sbr.rel (%p319) target = $region32
      $region31: #{conftree_forward.1} parent=5 // pred_region
        // Predicated region
        $region33: #{conftree_forward.1} parent=31 // pred_check
          %p322 = pneg %p37
        $region34: #{conftree_forward.1} parent=31 // pred_check_branch
          %324 = sbr.rel (%p322) target = $region36
        $region35: #{conftree_forward.1} parent=31 // pred_region
          %s325 = smul.u32 16, %s17
          %p326 = scmp.lt.s32.totalorder %s325, 31
          %s327 = scalar_select %p326, %s325, 31
          %s328 = smul.addr %s327, 4
          %s329 = scalar_lea.vmem %s0, %s328
          %s330 = smul.u32 16, %s17
        $region36: #{conftree_forward.1} parent=31 // pred_fallthru
          _
        // Predicated region
        $region37: #{conftree_forward.1} parent=31 // pred_check
          %p331 = pneg %p63
        $region38: #{conftree_forward.1} parent=31 // pred_check_branch
          %333 = sbr.rel (%p331) target = $region40
        $region39: #{conftree_forward.1} parent=31 // pred_region
          %s334 = smul.u32 16, %s17
          %p335 = scmp.lt.s32.totalorder %s334, 31
          %s336 = scalar_select %p335, %s334, 31
          %s337 = smul.addr %s336, 8
          %s338 = scalar_lea.vmem %s1, %s337
          %s339 = smul.u32 16, %s17
        $region40: #{conftree_forward.1} parent=31 // pred_fallthru
          _
        // Predicated region
        $region41: #{conftree_forward.1} parent=31 // pred_check
          %p340 = pneg %p89
        $region42: #{conftree_forward.1} parent=31 // pred_check_branch
          %342 = sbr.rel (%p340) target = $region44
        $region43: #{conftree_forward.1} parent=31 // pred_region
          %s343 = smul.u32 16, %s17
          %p344 = scmp.lt.s32.totalorder %s343, 31
          %s345 = scalar_select %p344, %s343, 31
          %s346 = smul.addr %s345, 8
          %s347 = scalar_lea.vmem %s2, %s346
          %s348 = smul.u32 16, %s17
        $region44: #{conftree_forward.1} parent=31 // pred_fallthru
          _
        // Predicated region
        $region45: #{conftree_forward.1} parent=31 // pred_check
          %p349 = pneg %p115
        $region46: #{conftree_forward.1} parent=31 // pred_check_branch
          %351 = sbr.rel (%p349) target = $region48
        $region47: #{conftree_forward.1} parent=31 // pred_region
          %s352 = smul.u32 16, %s17
          %p353 = scmp.lt.s32.totalorder %s352, 31
          %s354 = scalar_select %p353, %s352, 31
          %s355 = smul.addr %s354, 8
          %s356 = scalar_lea.vmem %s3, %s355
          %s357 = smul.u32 16, %s17
        $region48: #{conftree_forward.1} parent=31 // pred_fallthru
          _
        // Predicated region
        $region49: #{conftree_forward.1} parent=31 // pred_check
          %p358 = pneg %p141
        $region50: #{conftree_forward.1} parent=31 // pred_check_branch
          %360 = sbr.rel (%p358) target = $region52
        $region51: #{conftree_forward.1} parent=31 // pred_region
          %s361 = smul.u32 16, %s17
          %p362 = scmp.lt.s32.totalorder %s361, 31
          %s363 = scalar_select %p362, %s361, 31
          %s364 = smul.addr %s363, 8
          %s365 = scalar_lea.vmem %s4, %s364
          %s366 = smul.u32 16, %s17
        $region52: #{conftree_forward.1} parent=31 // pred_fallthru
          _
        // Predicated region
        $region53: #{conftree_forward.1} parent=31 // pred_check
          %p367 = pneg %p167
        $region54: #{conftree_forward.1} parent=31 // pred_check_branch
          %369 = sbr.rel (%p367) target = $region56
        $region55: #{conftree_forward.1} parent=31 // pred_region
          %s370 = smul.u32 16, %s17
          %p371 = scmp.lt.s32.totalorder %s370, 31
          %s372 = scalar_select %p371, %s370, 31
          %s373 = smul.addr %s372, 8
          %s374 = scalar_lea.vmem %s5, %s373
          %s375 = smul.u32 16, %s17
        $region56: #{conftree_forward.1} parent=31 // pred_fallthru
          _
      $region32: #{conftree_forward.1} parent=5 // pred_fallthru
        _
      %p376 = scmp.le.s32.totalorder 1, %s17
      %p377 = scmp.lt.s32.totalorder %s17, 3
      %p378 = pnand %p376, %p377
      %p379 = pneg %p378
      // Predicated region
      $region57: #{conftree_forward.1} parent=5 // pred_check
        _
      $region58: #{conftree_forward.1} parent=5 // pred_check_branch
        %381 = sbr.rel (%p378) target = $region60
      $region59: #{conftree_forward.1} parent=5 // pred_region
        %s382 = ssub.s32 %s17, 1
        // Predicated region
        $region61: #{conftree_forward.1} parent=59 // pred_check
          %p383 = pneg %p194
        $region62: #{conftree_forward.1} parent=59 // pred_check_branch
          %385 = sbr.rel (%p383) target = $region64
        $region63: #{conftree_forward.1} parent=59 // pred_region
          %386 = dma.done [#allocation3], 16
        $region64: #{conftree_forward.1} parent=59 // pred_fallthru
          _
        %387 = sfence
        %s388 = smul.u32 16, %s22
        %p389 = scmp.lt.s32.totalorder %s388, 31
        %s390 = scalar_select %p389, %s388, 31
        %s391 = smul.addr %s390, 4
        %s392 = scalar_lea.vmem %s0, %s391
        %p393 = pneg %p43
        %p394 = pneg %p40
        %s395 = smul.u32 16, %s22
        %p396 = scmp.lt.s32.totalorder %s395, 31
        %s397 = scalar_select %p396, %s395, 31
        %s398 = smul.addr %s397, 8
        %s399 = scalar_lea.vmem %s1, %s398
        %p400 = pneg %p69
        %p401 = pneg %p66
        %s402 = smul.u32 16, %s22
        %p403 = scmp.lt.s32.totalorder %s402, 31
        %s404 = scalar_select %p403, %s402, 31
        %s405 = smul.addr %s404, 8
        %s406 = scalar_lea.vmem %s2, %s405
        %p407 = pneg %p95
        %p408 = pneg %p92
        %s409 = smul.u32 16, %s22
        %p410 = scmp.lt.s32.totalorder %s409, 31
        %s411 = scalar_select %p410, %s409, 31
        %s412 = smul.addr %s411, 8
        %s413 = scalar_lea.vmem %s3, %s412
        %p414 = pneg %p121
        %p415 = pneg %p118
        %s416 = smul.u32 16, %s22
        %p417 = scmp.lt.s32.totalorder %s416, 31
        %s418 = scalar_select %p417, %s416, 31
        %s419 = smul.addr %s418, 8
        %s420 = scalar_lea.vmem %s4, %s419
        %p421 = pneg %p147
        %p422 = pneg %p144
        %s423 = smul.u32 16, %s22
        %p424 = scmp.lt.s32.totalorder %s423, 31
        %s425 = scalar_select %p424, %s423, 31
        %s426 = smul.addr %s425, 8
        %s427 = scalar_lea.vmem %s5, %s426
        %p428 = pneg %p173
        %p429 = pneg %p170
        %p430 = pneg %p194
        %p431 = pneg %p191
        %p432 = pneg %p215
        %p433 = pneg %p212
        %p434 = pneg %p236
        %p435 = pneg %p233
        %p436 = pneg %p257
        %p437 = pneg %p254
        %p438 = pneg %p283
        %p439 = pneg %p280
        %s440 = smul.u32 16, %s22
        %p441 = scmp.lt.s32.totalorder %s440, 31
        %s442 = scalar_select %p441, %s440, 31
        %s443 = smul.addr %s442, 8
        %s444 = scalar_lea.vmem %s10, %s443
        %s445 = smul.u32 16, %s22
        %p446 = scmp.lt.s32.totalorder %s445, 31
        %s447 = scalar_select %p446, %s445, 31
        %s448 = smul.addr %s447, 4
        %s449 = scalar_lea.vmem %s0, %s448
        %s450 = smul.u32 16, %s22
        %s451 = smul.u32 16, %s22
        %p452 = scmp.lt.s32.totalorder %s451, 31
        %s453 = scalar_select %p452, %s451, 31
        %s454 = smul.addr %s453, 8
        %s455 = scalar_lea.vmem %s1, %s454
        %s456 = smul.u32 16, %s22
        %s457 = smul.u32 16, %s22
        %p458 = scmp.lt.s32.totalorder %s457, 31
        %s459 = scalar_select %p458, %s457, 31
        %s460 = smul.addr %s459, 8
        %s461 = scalar_lea.vmem %s2, %s460
        %s462 = smul.u32 16, %s22
        %s463 = smul.u32 16, %s22
        %p464 = scmp.lt.s32.totalorder %s463, 31
        %s465 = scalar_select %p464, %s463, 31
        %s466 = smul.addr %s465, 8
        %s467 = scalar_lea.vmem %s3, %s466
        %s468 = smul.u32 16, %s22
        %s469 = smul.u32 16, %s22
        %p470 = scmp.lt.s32.totalorder %s469, 31
        %s471 = scalar_select %p470, %s469, 31
        %s472 = smul.addr %s471, 8
        %s473 = scalar_lea.vmem %s4, %s472
        %s474 = smul.u32 16, %s22
        %s475 = smul.u32 16, %s22
        %p476 = scmp.lt.s32.totalorder %s475, 31
        %s477 = scalar_select %p476, %s475, 31
        %s478 = smul.addr %s477, 8
        %s479 = scalar_lea.vmem %s5, %s478
        %s480 = smul.u32 16, %s22
        %s481 = smul.u32 16, %s22
        %p482 = scmp.lt.s32.totalorder %s481, 31
        %s483 = scalar_select %p482, %s481, 31
        %s484 = smul.addr %s483, 8
        %s485 = scalar_lea.vmem %s10, %s484
        %s486 = smul.u32 16, %s22
        %v488 = vld [vmem:[%s449] sm:$0xf]
        %v489 = vld [vmem:[%s449 + $0x4] sm:$0xf]
        %v490 = vld [vmem:[%s449 + $0x8] sm:$0xf]
        %v491 = vld [vmem:[%s449 + $0xc] sm:$0xf]
        %v492 = vld [vmem:[%s449 + $0x10] sm:$0xf]
        %v493 = vld [vmem:[%s449 + $0x14] sm:$0xf]
        %v494 = vld [vmem:[%s449 + $0x18] sm:$0xf]
        %v495 = vld [vmem:[%s449 + $0x1c] sm:$0xf]
        %v496 = vld [vmem:[%s449 + $0x20] sm:$0xf]
        %v497 = vld [vmem:[%s449 + $0x24] sm:$0xf]
        %v498 = vld [vmem:[%s449 + $0x28] sm:$0xf]
        %v499 = vld [vmem:[%s449 + $0x2c] sm:$0xf]
        %v500 = vld [vmem:[%s449 + $0x30] sm:$0xf]
        %v501 = vld [vmem:[%s449 + $0x34] sm:$0xf]
        %v502 = vld [vmem:[%s449 + $0x38] sm:$0xf]
        %v503 = vld [vmem:[%s449 + $0x3c] sm:$0xf]
        %v504 = vld [vmem:[%s455] sm:$0xff]
        %v505 = vld [vmem:[%s455 + $0x8] sm:$0xff]
        %v506 = vld [vmem:[%s455 + $0x10] sm:$0xff]
        %v507 = vld [vmem:[%s455 + $0x18] sm:$0xff]
        %v508 = vld [vmem:[%s455 + $0x20] sm:$0xff]
        %v509 = vld [vmem:[%s455 + $0x28] sm:$0xff]
        %v510 = vld [vmem:[%s455 + $0x30] sm:$0xff]
        %v511 = vld [vmem:[%s455 + $0x38] sm:$0xff]
        %v512 = vld [vmem:[%s455 + $0x40] sm:$0xff]
        %v513 = vld [vmem:[%s455 + $0x48] sm:$0xff]
        %v514 = vld [vmem:[%s455 + $0x50] sm:$0xff]
        %v515 = vld [vmem:[%s455 + $0x58] sm:$0xff]
        %v516 = vld [vmem:[%s455 + $0x60] sm:$0xff]
        %v517 = vld [vmem:[%s455 + $0x68] sm:$0xff]
        %v518 = vld [vmem:[%s455 + $0x70] sm:$0xff]
        %v519 = vld [vmem:[%s455 + $0x78] sm:$0xff]
        %v520 = vld [vmem:[%s7] sm:$0xff]
        %v521 = vld [vmem:[%s7 + $0x8] sm:$0xff]
        %v522 = vpack.c.bf16 %v521, %v520
        %v523 = vld [vmem:[%s7 + $0x10] sm:$0x1]
        %v524 = vld [vmem:[%s461] sm:$0xff]
        %v525 = vld [vmem:[%s461 + $0x8] sm:$0xff]
        %v526 = vld [vmem:[%s461 + $0x10] sm:$0xff]
        %v527 = vld [vmem:[%s461 + $0x18] sm:$0xff]
        %v528 = vld [vmem:[%s461 + $0x20] sm:$0xff]
        %v529 = vld [vmem:[%s461 + $0x28] sm:$0xff]
        %v530 = vld [vmem:[%s461 + $0x30] sm:$0xff]
        %v531 = vld [vmem:[%s461 + $0x38] sm:$0xff]
        %v532 = vld [vmem:[%s461 + $0x40] sm:$0xff]
        %v533 = vld [vmem:[%s461 + $0x48] sm:$0xff]
        %v534 = vld [vmem:[%s461 + $0x50] sm:$0xff]
        %v535 = vld [vmem:[%s461 + $0x58] sm:$0xff]
        %v536 = vld [vmem:[%s461 + $0x60] sm:$0xff]
        %v537 = vld [vmem:[%s461 + $0x68] sm:$0xff]
        %v538 = vld [vmem:[%s461 + $0x70] sm:$0xff]
        %v539 = vld [vmem:[%s461 + $0x78] sm:$0xff]
        %v540 = vpack.c.bf16 %v525, %v524
        %v541 = vpack.c.bf16 %v527, %v526
        %v542 = vpack.c.bf16 %v529, %v528
        %v543 = vpack.c.bf16 %v531, %v530
        %v544 = vpack.c.bf16 %v533, %v532
        %v545 = vpack.c.bf16 %v535, %v534
        %v546 = vpack.c.bf16 %v537, %v536
        %v547 = vpack.c.bf16 %v539, %v538
        %v548 = vld [vmem:[%s467] sm:$0xff]
        %v549 = vld [vmem:[%s467 + $0x8] sm:$0xff]
        %v550 = vld [vmem:[%s467 + $0x10] sm:$0xff]
        %v551 = vld [vmem:[%s467 + $0x18] sm:$0xff]
        %v552 = vld [vmem:[%s467 + $0x20] sm:$0xff]
        %v553 = vld [vmem:[%s467 + $0x28] sm:$0xff]
        %v554 = vld [vmem:[%s467 + $0x30] sm:$0xff]
        %v555 = vld [vmem:[%s467 + $0x38] sm:$0xff]
        %v556 = vld [vmem:[%s467 + $0x40] sm:$0xff]
        %v557 = vld [vmem:[%s467 + $0x48] sm:$0xff]
        %v558 = vld [vmem:[%s467 + $0x50] sm:$0xff]
        %v559 = vld [vmem:[%s467 + $0x58] sm:$0xff]
        %v560 = vld [vmem:[%s467 + $0x60] sm:$0xff]
        %v561 = vld [vmem:[%s467 + $0x68] sm:$0xff]
        %v562 = vld [vmem:[%s467 + $0x70] sm:$0xff]
        %v563 = vld [vmem:[%s467 + $0x78] sm:$0xff]
        %565 = vset.pattern.permute.xlu0 0
        %566 = vperm.xlu0 %565, %v548
        %v567 = vpop.permute.xlu0 %566
        %570 = vset.pattern.permute.xlu0 0
        %571 = vperm.xlu0 %570, %v549
        %v572 = vpop.permute.xlu0 %571
        %575 = vset.pattern.permute.xlu0 0
        %576 = vperm.xlu0 %575, %v550
        %v577 = vpop.permute.xlu0 %576
        %580 = vset.pattern.permute.xlu0 0
        %581 = vperm.xlu0 %580, %v551
        %v582 = vpop.permute.xlu0 %581
        %585 = vset.pattern.permute.xlu0 0
        %586 = vperm.xlu0 %585, %v552
        %v587 = vpop.permute.xlu0 %586
        %590 = vset.pattern.permute.xlu0 0
        %591 = vperm.xlu0 %590, %v553
        %v592 = vpop.permute.xlu0 %591
        %595 = vset.pattern.permute.xlu0 0
        %596 = vperm.xlu0 %595, %v554
        %v597 = vpop.permute.xlu0 %596
        %600 = vset.pattern.permute.xlu0 0
        %601 = vperm.xlu0 %600, %v555
        %v602 = vpop.permute.xlu0 %601
        %605 = vset.pattern.permute.xlu0 0
        %606 = vperm.xlu0 %605, %v556
        %v607 = vpop.permute.xlu0 %606
        %610 = vset.pattern.permute.xlu0 0
        %611 = vperm.xlu0 %610, %v557
        %v612 = vpop.permute.xlu0 %611
        %615 = vset.pattern.permute.xlu0 0
        %616 = vperm.xlu0 %615, %v558
        %v617 = vpop.permute.xlu0 %616
        %620 = vset.pattern.permute.xlu0 0
        %621 = vperm.xlu0 %620, %v559
        %v622 = vpop.permute.xlu0 %621
        %625 = vset.pattern.permute.xlu0 0
        %626 = vperm.xlu0 %625, %v560
        %v627 = vpop.permute.xlu0 %626
        %630 = vset.pattern.permute.xlu0 0
        %631 = vperm.xlu0 %630, %v561
        %v632 = vpop.permute.xlu0 %631
        %635 = vset.pattern.permute.xlu0 0
        %636 = vperm.xlu0 %635, %v562
        %v637 = vpop.permute.xlu0 %636
        %640 = vset.pattern.permute.xlu0 0
        %641 = vperm.xlu0 %640, %v563
        %v642 = vpop.permute.xlu0 %641
        %v644 = vlaneseq
        %v645 = vshrl.u32 %v644, 7
        %v646 = vsub.s32 0, %v645
        %v647 = vrot.slane %v523, %v646
        %v648 = vmul.f32 %v567, %v647
        %v649 = vmul.f32 %v572, %v647
        %v650 = vmul.f32 %v577, %v647
        %v651 = vmul.f32 %v582, %v647
        %v652 = vmul.f32 %v587, %v647
        %v653 = vmul.f32 %v592, %v647
        %v654 = vmul.f32 %v597, %v647
        %v655 = vmul.f32 %v602, %v647
        %v656 = vmul.f32 %v607, %v647
        %v657 = vmul.f32 %v612, %v647
        %v658 = vmul.f32 %v617, %v647
        %v659 = vmul.f32 %v622, %v647
        %v660 = vmul.f32 %v627, %v647
        %v661 = vmul.f32 %v632, %v647
        %v662 = vmul.f32 %v637, %v647
        %v663 = vmul.f32 %v642, %v647
        %vm664 = vcmask 130048
        %v666 = vsel %vm664, %v540, 0
        %v669 = vsel %vm664, %v541, 0
        %v672 = vsel %vm664, %v542, 0
        %v675 = vsel %vm664, %v543, 0
        %v678 = vsel %vm664, %v544, 0
        %v681 = vsel %vm664, %v545, 0
        %v684 = vsel %vm664, %v546, 0
        %v687 = vsel %vm664, %v547, 0
        %689 = vmatprep.subr.bf16.mxu0 0
        %690 = vmatpush1.bf16.msra.mxu0 %v522
        %691 = vmatprep.subr.bf16.mxu0 0
        %692 = vmatpush1.bf16.msra.mxu0 0
        %693 = vmatprep.subr.bf16.mxu0 0
        %694 = vmatpush1.bf16.msra.mxu0 0
        %695 = vmatprep.subr.bf16.mxu0 0
        %696 = vmatpush1.bf16.msra.mxu0 0
        %697 = vmatprep.subr.bf16.mxu0 0
        %698 = vmatpush1.bf16.msra.mxu0 0
        %699 = vmatprep.subr.bf16.mxu0 0
        %700 = vmatpush1.bf16.msra.mxu0 0
        %701 = vmatprep.subr.bf16.mxu0 0
        %702 = vmatpush1.bf16.msra.mxu0 0
        %703 = vmatprep.subr.bf16.mxu0 0
        %704 = vmatpush1.bf16.msra.mxu0 0
        %705 = vmatprep.subr.bf16.mxu0 0
        %706 = vmatpush1.bf16.msra.mxu0 0
        %707 = vmatprep.subr.bf16.mxu0 0
        %708 = vmatpush1.bf16.msra.mxu0 0
        %709 = vmatprep.subr.bf16.mxu0 0
        %710 = vmatpush1.bf16.msra.mxu0 0
        %711 = vmatprep.subr.bf16.mxu0 0
        %712 = vmatpush1.bf16.msra.mxu0 0
        %713 = vmatprep.subr.bf16.mxu0 0
        %714 = vmatpush1.bf16.msra.mxu0 0
        %715 = vmatprep.subr.bf16.mxu0 0
        %716 = vmatpush1.bf16.msra.mxu0 0
        %717 = vmatprep.subr.bf16.mxu0 0
        %718 = vmatpush1.bf16.msra.mxu0 0
        %719 = vmatprep.subr.bf16.mxu0 0
        %720 = vmatpush1.bf16.msra.mxu0 0
        %721 = vmatprep.mubr.bf16.mxu0 0
        %722 = vmatmul.mubr.bf16.gmra.mrb[0].mxu0 %v666
        %v723 = vpop.f32.mrb[0].mxu0
        %v724 = vadd.f32 %v648, %v723
        %v725 = vpop.f32.mrb[0].mxu0
        %v726 = vpop.f32.mrb[0].mxu0
        %v727 = vadd.f32 %v649, %v726
        %v728 = vpop.f32.mrb[0].mxu0
        %729 = vmatprep.mubr.bf16.mxu0 0
        %730 = vmatmul.mubr.bf16.gmra.mrb[0].mxu0 %v669
        %v731 = vpop.f32.mrb[0].mxu0
        %v732 = vadd.f32 %v650, %v731
        %v733 = vpop.f32.mrb[0].mxu0
        %v734 = vpop.f32.mrb[0].mxu0
        %v735 = vadd.f32 %v651, %v734
        %v736 = vpop.f32.mrb[0].mxu0
        %737 = vmatprep.mubr.bf16.mxu0 0
        %738 = vmatmul.mubr.bf16.gmra.mrb[0].mxu0 %v672
        %v739 = vpop.f32.mrb[0].mxu0
        %v740 = vadd.f32 %v652, %v739
        %v741 = vpop.f32.mrb[0].mxu0
        %v742 = vpop.f32.mrb[0].mxu0
        %v743 = vadd.f32 %v653, %v742
        %v744 = vpop.f32.mrb[0].mxu0
        %745 = vmatprep.mubr.bf16.mxu0 0
        %746 = vmatmul.mubr.bf16.gmra.mrb[0].mxu0 %v675
        %v747 = vpop.f32.mrb[0].mxu0
        %v748 = vadd.f32 %v654, %v747
        %v749 = vpop.f32.mrb[0].mxu0
        %v750 = vpop.f32.mrb[0].mxu0
        %v751 = vadd.f32 %v655, %v750
        %v752 = vpop.f32.mrb[0].mxu0
        %753 = vmatprep.mubr.bf16.mxu0 0
        %754 = vmatmul.mubr.bf16.gmra.mrb[0].mxu0 %v678
        %v755 = vpop.f32.mrb[0].mxu0
        %v756 = vadd.f32 %v656, %v755
        %v757 = vpop.f32.mrb[0].mxu0
        %v758 = vpop.f32.mrb[0].mxu0
        %v759 = vadd.f32 %v657, %v758
        %v760 = vpop.f32.mrb[0].mxu0
        %761 = vmatprep.mubr.bf16.mxu0 0
        %762 = vmatmul.mubr.bf16.gmra.mrb[0].mxu0 %v681
        %v763 = vpop.f32.mrb[0].mxu0
        %v764 = vadd.f32 %v658, %v763
        %v765 = vpop.f32.mrb[0].mxu0
        %v766 = vpop.f32.mrb[0].mxu0
        %v767 = vadd.f32 %v659, %v766
        %v768 = vpop.f32.mrb[0].mxu0
        %769 = vmatprep.mubr.bf16.mxu0 0
        %770 = vmatmul.mubr.bf16.gmra.mrb[0].mxu0 %v684
        %v771 = vpop.f32.mrb[0].mxu0
        %v772 = vadd.f32 %v660, %v771
        %v773 = vpop.f32.mrb[0].mxu0
        %v774 = vpop.f32.mrb[0].mxu0
        %v775 = vadd.f32 %v661, %v774
        %v776 = vpop.f32.mrb[0].mxu0
        %777 = vmatprep.mubr.bf16.mxu0 0
        %778 = vmatmul.mubr.bf16.gmra.mrb[0].mxu0 %v687
        %v779 = vpop.f32.mrb[0].mxu0
        %v780 = vadd.f32 %v662, %v779
        %v781 = vpop.f32.mrb[0].mxu0
        %v782 = vpop.f32.mrb[0].mxu0
        %v783 = vadd.f32 %v663, %v782
        %v784 = vpop.f32.mrb[0].mxu0
        %785 = vdwg.mxu0
        %s786 = sld [smem:[#allocation2]]
        %v787 = vld [vmem:[%s8] sm:$0xff]
        %v788 = vld [vmem:[%s8 + $0x8] sm:$0xff]
        %v789 = vld [vmem:[%s8 + $0x10] sm:$0xff]
        %v790 = vld [vmem:[%s8 + $0x18] sm:$0xff]
        %v791 = vpack.c.bf16 %v788, %v787
        %v792 = vpack.c.bf16 %v790, %v789
        %v793 = vld [vmem:[%s8 + $0x20] sm:$0x1]
        %v794 = vld [vmem:[%s7 + $0x18] sm:$0xff]
        %v795 = vld [vmem:[%s7 + $0x20] sm:$0xff]
        %v796 = vld [vmem:[%s7 + $0x28] sm:$0xff]
        %v797 = vld [vmem:[%s7 + $0x30] sm:$0xff]
        %v798 = vld [vmem:[%s7 + $0x38] sm:$0xff]
        %v799 = vld [vmem:[%s7 + $0x40] sm:$0xff]
        %v800 = vld [vmem:[%s7 + $0x48] sm:$0xff]
        %v801 = vld [vmem:[%s7 + $0x50] sm:$0xff]
        %v802 = vpack.c.bf16 %v795, %v794
        %v803 = vpack.c.bf16 %v797, %v796
        %v804 = vpack.c.bf16 %v799, %v798
        %v805 = vpack.c.bf16 %v801, %v800
        %v806 = vld [vmem:[%s7 + $0x58] sm:$0x1]
        %v807 = vpack.c.bf16 %v505, %v504
        %v808 = vpack.c.bf16 %v507, %v506
        %v809 = vpack.c.bf16 %v509, %v508
        %v810 = vpack.c.bf16 %v511, %v510
        %v811 = vpack.c.bf16 %v513, %v512
        %v812 = vpack.c.bf16 %v515, %v514
        %v813 = vpack.c.bf16 %v517, %v516
        %v814 = vpack.c.bf16 %v519, %v518
        %v831 = vunpack.c.l.b16 %v488
        %v832 = vunpack.c.l.b16 %v489
        %v833 = vunpack.c.l.b16 %v490
        %v834 = vunpack.c.l.b16 %v491
        %v835 = vunpack.c.l.b16 %v492
        %v836 = vunpack.c.l.b16 %v493
        %v837 = vunpack.c.l.b16 %v494
        %v838 = vunpack.c.l.b16 %v495
        %v839 = vunpack.c.l.b16 %v496
        %v840 = vunpack.c.l.b16 %v497
        %v841 = vunpack.c.l.b16 %v498
        %v842 = vunpack.c.l.b16 %v499
        %v843 = vunpack.c.l.b16 %v500
        %v844 = vunpack.c.l.b16 %v501
        %v845 = vunpack.c.l.b16 %v502
        %v846 = vunpack.c.l.b16 %v503
        %v847 = vpack.c.b16 %v832, %v831
        %v848 = vpack.c.b16 %v834, %v833
        %v849 = vpack.c.b16 %v836, %v835
        %v850 = vpack.c.b16 %v838, %v837
        %v851 = vpack.c.b16 %v840, %v839
        %v852 = vpack.c.b16 %v842, %v841
        %v853 = vpack.c.b16 %v844, %v843
        %v854 = vpack.c.b16 %v846, %v845
        %863 = vmatprep.subr.bf16.mxu0 0
        %864 = vmatpush1.bf16.msra.mxu0 %v807
        %865 = vmatprep.subr.bf16.mxu0 0
        %866 = vmatpush1.bf16.msra.mxu0 %v808
        %867 = vmatprep.subr.bf16.mxu0 0
        %868 = vmatpush1.bf16.msra.mxu0 %v809
        %869 = vmatprep.subr.bf16.mxu0 0
        %870 = vmatpush1.bf16.msra.mxu0 %v810
        %871 = vmatprep.subr.bf16.mxu0 0
        %872 = vmatpush1.bf16.msra.mxu0 %v811
        %873 = vmatprep.subr.bf16.mxu0 0
        %874 = vmatpush1.bf16.msra.mxu0 %v812
        %875 = vmatprep.subr.bf16.mxu0 0
        %876 = vmatpush1.bf16.msra.mxu0 %v813
        %877 = vmatprep.subr.bf16.mxu0 0
        %878 = vmatpush1.bf16.msra.mxu0 %v814
        %879 = vmatprep.subr.bf16.mxu0 0
        %880 = vmatpush1.bf16.msra.mxu0 0
        %881 = vmatprep.subr.bf16.mxu0 0
        %882 = vmatpush1.bf16.msra.mxu0 0
        %883 = vmatprep.subr.bf16.mxu0 0
        %884 = vmatpush1.bf16.msra.mxu0 0
        %885 = vmatprep.subr.bf16.mxu0 0
        %886 = vmatpush1.bf16.msra.mxu0 0
        %887 = vmatprep.subr.bf16.mxu0 0
        %888 = vmatpush1.bf16.msra.mxu0 0
        %889 = vmatprep.subr.bf16.mxu0 0
        %890 = vmatpush1.bf16.msra.mxu0 0
        %891 = vmatprep.subr.bf16.mxu0 0
        %892 = vmatpush1.bf16.msra.mxu0 0
        %893 = vmatprep.subr.bf16.mxu0 0
        %894 = vmatpush1.bf16.msra.mxu0 0
        %895 = vmatprep.mubr.bf16.mxu0 0
        %896 = vmatmul.mubr.bf16.gmra.mrb[0].mxu0 %v847
        %v897 = vpop.f32.mrb[0].mxu0
        %v898 = vadd.f32 %v724, %v897
        %v899 = vpop.f32.mrb[0].mxu0
        %v900 = vpop.f32.mrb[0].mxu0
        %v901 = vadd.f32 %v727, %v900
        %v902 = vpop.f32.mrb[0].mxu0
        %903 = vmatprep.mubr.bf16.mxu0 0
        %904 = vmatmul.mubr.bf16.gmra.mrb[0].mxu0 %v848
        %v905 = vpop.f32.mrb[0].mxu0
        %v906 = vadd.f32 %v732, %v905
        %v907 = vpop.f32.mrb[0].mxu0
        %v908 = vpop.f32.mrb[0].mxu0
        %v909 = vadd.f32 %v735, %v908
        %v910 = vpop.f32.mrb[0].mxu0
        %911 = vmatprep.mubr.bf16.mxu0 0
        %912 = vmatmul.mubr.bf16.gmra.mrb[0].mxu0 %v849
        %v913 = vpop.f32.mrb[0].mxu0
        %v914 = vadd.f32 %v740, %v913
        %v915 = vpop.f32.mrb[0].mxu0
        %v916 = vpop.f32.mrb[0].mxu0
        %v917 = vadd.f32 %v743, %v916
        %v918 = vpop.f32.mrb[0].mxu0
        %919 = vmatprep.mubr.bf16.mxu0 0
        %920 = vmatmul.mubr.bf16.gmra.mrb[0].mxu0 %v850
        %v921 = vpop.f32.mrb[0].mxu0
        %v922 = vadd.f32 %v748, %v921
        %v923 = vpop.f32.mrb[0].mxu0
        %v924 = vpop.f32.mrb[0].mxu0
        %v925 = vadd.f32 %v751, %v924
        %v926 = vpop.f32.mrb[0].mxu0
        %927 = vmatprep.mubr.bf16.mxu0 0
        %928 = vmatmul.mubr.bf16.gmra.mrb[0].mxu0 %v851
        %v929 = vpop.f32.mrb[0].mxu0
        %v930 = vadd.f32 %v756, %v929
        %v931 = vpop.f32.mrb[0].mxu0
        %v932 = vpop.f32.mrb[0].mxu0
        %v933 = vadd.f32 %v759, %v932
        %v934 = vpop.f32.mrb[0].mxu0
        %935 = vmatprep.mubr.bf16.mxu0 0
        %936 = vmatmul.mubr.bf16.gmra.mrb[0].mxu0 %v852
        %v937 = vpop.f32.mrb[0].mxu0
        %v938 = vadd.f32 %v764, %v937
        %v939 = vpop.f32.mrb[0].mxu0
        %v940 = vpop.f32.mrb[0].mxu0
        %v941 = vadd.f32 %v767, %v940
        %v942 = vpop.f32.mrb[0].mxu0
        %943 = vmatprep.mubr.bf16.mxu0 0
        %944 = vmatmul.mubr.bf16.gmra.mrb[0].mxu0 %v853
        %v945 = vpop.f32.mrb[0].mxu0
        %v946 = vadd.f32 %v772, %v945
        %v947 = vpop.f32.mrb[0].mxu0
        %v948 = vpop.f32.mrb[0].mxu0
        %v949 = vadd.f32 %v775, %v948
        %v950 = vpop.f32.mrb[0].mxu0
        %951 = vmatprep.mubr.bf16.mxu0 0
        %952 = vmatmul.mubr.bf16.gmra.mrb[0].mxu0 %v854
        %v953 = vpop.f32.mrb[0].mxu0
        %v954 = vadd.f32 %v780, %v953
        %v955 = vpop.f32.mrb[0].mxu0
        %v956 = vpop.f32.mrb[0].mxu0
        %v957 = vadd.f32 %v783, %v956
        %v958 = vpop.f32.mrb[0].mxu0
        %959 = vdwg.mxu0
        %s960 = sadd.f32 %s786, 1.0
        %v961 = vstv %s960
        %v962 = vmul.f32 %v961, %v504
        %v963 = vmul.f32 %v961, %v505
        %v964 = vmul.f32 %v961, %v506
        %v965 = vmul.f32 %v961, %v507
        %v966 = vmul.f32 %v961, %v508
        %v967 = vmul.f32 %v961, %v509
        %v968 = vmul.f32 %v961, %v510
        %v969 = vmul.f32 %v961, %v511
        %v970 = vmul.f32 %v961, %v512
        %v971 = vmul.f32 %v961, %v513
        %v972 = vmul.f32 %v961, %v514
        %v973 = vmul.f32 %v961, %v515
        %v974 = vmul.f32 %v961, %v516
        %v975 = vmul.f32 %v961, %v517
        %v976 = vmul.f32 %v961, %v518
        %v977 = vmul.f32 %v961, %v519
        %v978 = vadd.f32 %v962, %v898
        %v979 = vadd.f32 %v963, %v901
        %v980 = vadd.f32 %v964, %v906
        %v981 = vadd.f32 %v965, %v909
        %v982 = vadd.f32 %v966, %v914
        %v983 = vadd.f32 %v967, %v917
        %v984 = vadd.f32 %v968, %v922
        %v985 = vadd.f32 %v969, %v925
        %v986 = vadd.f32 %v970, %v930
        %v987 = vadd.f32 %v971, %v933
        %v988 = vadd.f32 %v972, %v938
        %v989 = vadd.f32 %v973, %v941
        %v990 = vadd.f32 %v974, %v946
        %v991 = vadd.f32 %v975, %v949
        %v992 = vadd.f32 %v976, %v954
        %v993 = vadd.f32 %v977, %v957
        %v994 = vpack.c.bf16 %v979, %v978
        %v995 = vpack.c.bf16 %v981, %v980
        %v996 = vpack.c.bf16 %v983, %v982
        %v997 = vpack.c.bf16 %v985, %v984
        %v998 = vpack.c.bf16 %v987, %v986
        %v999 = vpack.c.bf16 %v989, %v988
        %v1000 = vpack.c.bf16 %v991, %v990
        %v1001 = vpack.c.bf16 %v993, %v992
        %v1002 = vlaneseq
        %v1003 = vshrl.u32 %v1002, 7
        %v1004 = vsub.s32 0, %v1003
        %v1005 = vrot.slane %v793, %v1004
        %vm1006 = vcmask 261120
        %v1008 = vsel %vm1006, %v994, 0
        %v1011 = vsel %vm1006, %v995, 0
        %v1014 = vsel %vm1006, %v996, 0
        %v1017 = vsel %vm1006, %v997, 0
        %v1020 = vsel %vm1006, %v998, 0
        %v1023 = vsel %vm1006, %v999, 0
        %v1026 = vsel %vm1006, %v1000, 0
        %v1029 = vsel %vm1006, %v1001, 0
        %1031 = vmatprep.subr.bf16.mxu0 0
        %1032 = vmatpush1.bf16.msra.mxu0 %v791
        %1033 = vmatprep.subr.bf16.mxu0 0
        %1034 = vmatpush1.bf16.msra.mxu0 %v792
        %1035 = vmatprep.subr.bf16.mxu0 0
        %1036 = vmatpush1.bf16.msra.mxu0 0
        %1037 = vmatprep.subr.bf16.mxu0 0
        %1038 = vmatpush1.bf16.msra.mxu0 0
        %1039 = vmatprep.subr.bf16.mxu0 0
        %1040 = vmatpush1.bf16.msra.mxu0 0
        %1041 = vmatprep.subr.bf16.mxu0 0
        %1042 = vmatpush1.bf16.msra.mxu0 0
        %1043 = vmatprep.subr.bf16.mxu0 0
        %1044 = vmatpush1.bf16.msra.mxu0 0
        %1045 = vmatprep.subr.bf16.mxu0 0
        %1046 = vmatpush1.bf16.msra.mxu0 0
        %1047 = vmatprep.subr.bf16.mxu0 0
        %1048 = vmatpush1.bf16.msra.mxu0 0
        %1049 = vmatprep.subr.bf16.mxu0 0
        %1050 = vmatpush1.bf16.msra.mxu0 0
        %1051 = vmatprep.subr.bf16.mxu0 0
        %1052 = vmatpush1.bf16.msra.mxu0 0
        %1053 = vmatprep.subr.bf16.mxu0 0
        %1054 = vmatpush1.bf16.msra.mxu0 0
        %1055 = vmatprep.subr.bf16.mxu0 0
        %1056 = vmatpush1.bf16.msra.mxu0 0
        %1057 = vmatprep.subr.bf16.mxu0 0
        %1058 = vmatpush1.bf16.msra.mxu0 0
        %1059 = vmatprep.subr.bf16.mxu0 0
        %1060 = vmatpush1.bf16.msra.mxu0 0
        %1061 = vmatprep.subr.bf16.mxu0 0
        %1062 = vmatpush1.bf16.msra.mxu0 0
        %1063 = vmatprep.mubr.bf16.mxu0 0
        %1064 = vmatmul.mubr.bf16.gmra.mrb[0].mxu0 %v1008
        %v1065 = vpop.f32.mrb[0].mxu0
        %v1066 = vadd.f32 %v1005, %v1065
        %v1067 = vpop.f32.mrb[0].mxu0
        %v1068 = vpop.f32.mrb[0].mxu0
        %v1069 = vadd.f32 %v1005, %v1068
        %v1070 = vpop.f32.mrb[0].mxu0
        %1071 = vmatprep.mubr.bf16.mxu0 0
        %1072 = vmatmul.mubr.bf16.gmra.mrb[0].mxu0 %v1011
        %v1073 = vpop.f32.mrb[0].mxu0
        %v1074 = vadd.f32 %v1005, %v1073
        %v1075 = vpop.f32.mrb[0].mxu0
        %v1076 = vpop.f32.mrb[0].mxu0
        %v1077 = vadd.f32 %v1005, %v1076
        %v1078 = vpop.f32.mrb[0].mxu0
        %1079 = vmatprep.mubr.bf16.mxu0 0
        %1080 = vmatmul.mubr.bf16.gmra.mrb[0].mxu0 %v1014
        %v1081 = vpop.f32.mrb[0].mxu0
        %v1082 = vadd.f32 %v1005, %v1081
        %v1083 = vpop.f32.mrb[0].mxu0
        %v1084 = vpop.f32.mrb[0].mxu0
        %v1085 = vadd.f32 %v1005, %v1084
        %v1086 = vpop.f32.mrb[0].mxu0
        %1087 = vmatprep.mubr.bf16.mxu0 0
        %1088 = vmatmul.mubr.bf16.gmra.mrb[0].mxu0 %v1017
        %v1089 = vpop.f32.mrb[0].mxu0
        %v1090 = vadd.f32 %v1005, %v1089
        %v1091 = vpop.f32.mrb[0].mxu0
        %v1092 = vpop.f32.mrb[0].mxu0
        %v1093 = vadd.f32 %v1005, %v1092
        %v1094 = vpop.f32.mrb[0].mxu0
        %1095 = vmatprep.mubr.bf16.mxu0 0
        %1096 = vmatmul.mubr.bf16.gmra.mrb[0].mxu0 %v1020
        %v1097 = vpop.f32.mrb[0].mxu0
        %v1098 = vadd.f32 %v1005, %v1097
        %v1099 = vpop.f32.mrb[0].mxu0
        %v1100 = vpop.f32.mrb[0].mxu0
        %v1101 = vadd.f32 %v1005, %v1100
        %v1102 = vpop.f32.mrb[0].mxu0
        %1103 = vmatprep.mubr.bf16.mxu0 0
        %1104 = vmatmul.mubr.bf16.gmra.mrb[0].mxu0 %v1023
        %v1105 = vpop.f32.mrb[0].mxu0
        %v1106 = vadd.f32 %v1005, %v1105
        %v1107 = vpop.f32.mrb[0].mxu0
        %v1108 = vpop.f32.mrb[0].mxu0
        %v1109 = vadd.f32 %v1005, %v1108
        %v1110 = vpop.f32.mrb[0].mxu0
        %1111 = vmatprep.mubr.bf16.mxu0 0
        %1112 = vmatmul.mubr.bf16.gmra.mrb[0].mxu0 %v1026
        %v1113 = vpop.f32.mrb[0].mxu0
        %v1114 = vadd.f32 %v1005, %v1113
        %v1115 = vpop.f32.mrb[0].mxu0
        %v1116 = vpop.f32.mrb[0].mxu0
        %v1117 = vadd.f32 %v1005, %v1116
        %v1118 = vpop.f32.mrb[0].mxu0
        %1119 = vmatprep.mubr.bf16.mxu0 0
        %1120 = vmatmul.mubr.bf16.gmra.mrb[0].mxu0 %v1029
        %v1121 = vpop.f32.mrb[0].mxu0
        %v1122 = vadd.f32 %v1005, %v1121
        %v1123 = vpop.f32.mrb[0].mxu0
        %v1124 = vpop.f32.mrb[0].mxu0
        %v1125 = vadd.f32 %v1005, %v1124
        %v1126 = vpop.f32.mrb[0].mxu0
        %1127 = vdwg.mxu0
        %v1128 = vmax.f32 %v1066, 0.0
        %v1129 = vmax.f32 %v1069, 0.0
        %v1130 = vmax.f32 %v1074, 0.0
        %v1131 = vmax.f32 %v1077, 0.0
        %v1132 = vmax.f32 %v1082, 0.0
        %v1133 = vmax.f32 %v1085, 0.0
        %v1134 = vmax.f32 %v1090, 0.0
        %v1135 = vmax.f32 %v1093, 0.0
        %v1136 = vmax.f32 %v1098, 0.0
        %v1137 = vmax.f32 %v1101, 0.0
        %v1138 = vmax.f32 %v1106, 0.0
        %v1139 = vmax.f32 %v1109, 0.0
        %v1140 = vmax.f32 %v1114, 0.0
        %v1141 = vmax.f32 %v1117, 0.0
        %v1142 = vmax.f32 %v1122, 0.0
        %v1143 = vmax.f32 %v1125, 0.0
        %v1144 = vpack.c.bf16 %v1129, %v1128
        %v1145 = vpack.c.bf16 %v1131, %v1130
        %v1146 = vpack.c.bf16 %v1133, %v1132
        %v1147 = vpack.c.bf16 %v1135, %v1134
        %v1148 = vpack.c.bf16 %v1137, %v1136
        %v1149 = vpack.c.bf16 %v1139, %v1138
        %v1150 = vpack.c.bf16 %v1141, %v1140
        %v1151 = vpack.c.bf16 %v1143, %v1142
        %v1152 = vlaneseq
        %v1153 = vshrl.u32 %v1152, 7
        %v1154 = vsub.s32 0, %v1153
        %v1155 = vrot.slane %v806, %v1154
        %vm1156 = vcmask 523264
        %v1158 = vsel %vm1156, %v1144, 0
        %v1161 = vsel %vm1156, %v1145, 0
        %v1164 = vsel %vm1156, %v1146, 0
        %v1167 = vsel %vm1156, %v1147, 0
        %v1170 = vsel %vm1156, %v1148, 0
        %v1173 = vsel %vm1156, %v1149, 0
        %v1176 = vsel %vm1156, %v1150, 0
        %v1179 = vsel %vm1156, %v1151, 0
        %1181 = vmatprep.subr.bf16.mxu0 0
        %1182 = vmatpush1.bf16.msra.mxu0 %v802
        %1183 = vmatprep.subr.bf16.mxu0 0
        %1184 = vmatpush1.bf16.msra.mxu0 %v803
        %1185 = vmatprep.subr.bf16.mxu0 0
        %1186 = vmatpush1.bf16.msra.mxu0 %v804
        %1187 = vmatprep.subr.bf16.mxu0 0
        %1188 = vmatpush1.bf16.msra.mxu0 %v805
        %1189 = vmatprep.subr.bf16.mxu0 0
        %1190 = vmatpush1.bf16.msra.mxu0 0
        %1191 = vmatprep.subr.bf16.mxu0 0
        %1192 = vmatpush1.bf16.msra.mxu0 0
        %1193 = vmatprep.subr.bf16.mxu0 0
        %1194 = vmatpush1.bf16.msra.mxu0 0
        %1195 = vmatprep.subr.bf16.mxu0 0
        %1196 = vmatpush1.bf16.msra.mxu0 0
        %1197 = vmatprep.subr.bf16.mxu0 0
        %1198 = vmatpush1.bf16.msra.mxu0 0
        %1199 = vmatprep.subr.bf16.mxu0 0
        %1200 = vmatpush1.bf16.msra.mxu0 0
        %1201 = vmatprep.subr.bf16.mxu0 0
        %1202 = vmatpush1.bf16.msra.mxu0 0
        %1203 = vmatprep.subr.bf16.mxu0 0
        %1204 = vmatpush1.bf16.msra.mxu0 0
        %1205 = vmatprep.subr.bf16.mxu0 0
        %1206 = vmatpush1.bf16.msra.mxu0 0
        %1207 = vmatprep.subr.bf16.mxu0 0
        %1208 = vmatpush1.bf16.msra.mxu0 0
        %1209 = vmatprep.subr.bf16.mxu0 0
        %1210 = vmatpush1.bf16.msra.mxu0 0
        %1211 = vmatprep.subr.bf16.mxu0 0
        %1212 = vmatpush1.bf16.msra.mxu0 0
        %1213 = vmatprep.mubr.bf16.mxu0 0
        %1214 = vmatmul.mubr.bf16.gmra.mrb[0].mxu0 %v1158
        %v1215 = vpop.f32.mrb[0].mxu0
        %v1216 = vadd.f32 %v1155, %v1215
        %v1217 = vpop.f32.mrb[0].mxu0
        %v1218 = vpop.f32.mrb[0].mxu0
        %v1219 = vadd.f32 %v1155, %v1218
        %v1220 = vpop.f32.mrb[0].mxu0
        %1221 = vmatprep.mubr.bf16.mxu0 0
        %1222 = vmatmul.mubr.bf16.gmra.mrb[0].mxu0 %v1161
        %v1223 = vpop.f32.mrb[0].mxu0
        %v1224 = vadd.f32 %v1155, %v1223
        %v1225 = vpop.f32.mrb[0].mxu0
        %v1226 = vpop.f32.mrb[0].mxu0
        %v1227 = vadd.f32 %v1155, %v1226
        %v1228 = vpop.f32.mrb[0].mxu0
        %1229 = vmatprep.mubr.bf16.mxu0 0
        %1230 = vmatmul.mubr.bf16.gmra.mrb[0].mxu0 %v1164
        %v1231 = vpop.f32.mrb[0].mxu0
        %v1232 = vadd.f32 %v1155, %v1231
        %v1233 = vpop.f32.mrb[0].mxu0
        %v1234 = vpop.f32.mrb[0].mxu0
        %v1235 = vadd.f32 %v1155, %v1234
        %v1236 = vpop.f32.mrb[0].mxu0
        %1237 = vmatprep.mubr.bf16.mxu0 0
        %1238 = vmatmul.mubr.bf16.gmra.mrb[0].mxu0 %v1167
        %v1239 = vpop.f32.mrb[0].mxu0
        %v1240 = vadd.f32 %v1155, %v1239
        %v1241 = vpop.f32.mrb[0].mxu0
        %v1242 = vpop.f32.mrb[0].mxu0
        %v1243 = vadd.f32 %v1155, %v1242
        %v1244 = vpop.f32.mrb[0].mxu0
        %1245 = vmatprep.mubr.bf16.mxu0 0
        %1246 = vmatmul.mubr.bf16.gmra.mrb[0].mxu0 %v1170
        %v1247 = vpop.f32.mrb[0].mxu0
        %v1248 = vadd.f32 %v1155, %v1247
        %v1249 = vpop.f32.mrb[0].mxu0
        %v1250 = vpop.f32.mrb[0].mxu0
        %v1251 = vadd.f32 %v1155, %v1250
        %v1252 = vpop.f32.mrb[0].mxu0
        %1253 = vmatprep.mubr.bf16.mxu0 0
        %1254 = vmatmul.mubr.bf16.gmra.mrb[0].mxu0 %v1173
        %v1255 = vpop.f32.mrb[0].mxu0
        %v1256 = vadd.f32 %v1155, %v1255
        %v1257 = vpop.f32.mrb[0].mxu0
        %v1258 = vpop.f32.mrb[0].mxu0
        %v1259 = vadd.f32 %v1155, %v1258
        %v1260 = vpop.f32.mrb[0].mxu0
        %1261 = vmatprep.mubr.bf16.mxu0 0
        %1262 = vmatmul.mubr.bf16.gmra.mrb[0].mxu0 %v1176
        %v1263 = vpop.f32.mrb[0].mxu0
        %v1264 = vadd.f32 %v1155, %v1263
        %v1265 = vpop.f32.mrb[0].mxu0
        %v1266 = vpop.f32.mrb[0].mxu0
        %v1267 = vadd.f32 %v1155, %v1266
        %v1268 = vpop.f32.mrb[0].mxu0
        %1269 = vmatprep.mubr.bf16.mxu0 0
        %1270 = vmatmul.mubr.bf16.gmra.mrb[0].mxu0 %v1179
        %v1271 = vpop.f32.mrb[0].mxu0
        %v1272 = vadd.f32 %v1155, %v1271
        %v1273 = vpop.f32.mrb[0].mxu0
        %v1274 = vpop.f32.mrb[0].mxu0
        %v1275 = vadd.f32 %v1155, %v1274
        %v1276 = vpop.f32.mrb[0].mxu0
        %1277 = vdwg.mxu0
        %v1278 = vmax.f32 %v1216, 0.0
        %v1279 = vmax.f32 %v1219, 0.0
        %v1280 = vmax.f32 %v1224, 0.0
        %v1281 = vmax.f32 %v1227, 0.0
        %v1282 = vmax.f32 %v1232, 0.0
        %v1283 = vmax.f32 %v1235, 0.0
        %v1284 = vmax.f32 %v1240, 0.0
        %v1285 = vmax.f32 %v1243, 0.0
        %v1286 = vmax.f32 %v1248, 0.0
        %v1287 = vmax.f32 %v1251, 0.0
        %v1288 = vmax.f32 %v1256, 0.0
        %v1289 = vmax.f32 %v1259, 0.0
        %v1290 = vmax.f32 %v1264, 0.0
        %v1291 = vmax.f32 %v1267, 0.0
        %v1292 = vmax.f32 %v1272, 0.0
        %v1293 = vmax.f32 %v1275, 0.0
        %v1294 = vadd.f32 %v1278, %v504
        %v1295 = vadd.f32 %v1279, %v505
        %v1296 = vadd.f32 %v1280, %v506
        %v1297 = vadd.f32 %v1281, %v507
        %v1298 = vadd.f32 %v1282, %v508
        %v1299 = vadd.f32 %v1283, %v509
        %v1300 = vadd.f32 %v1284, %v510
        %v1301 = vadd.f32 %v1285, %v511
        %v1302 = vadd.f32 %v1286, %v512
        %v1303 = vadd.f32 %v1287, %v513
        %v1304 = vadd.f32 %v1288, %v514
        %v1305 = vadd.f32 %v1289, %v515
        %v1306 = vadd.f32 %v1290, %v516
        %v1307 = vadd.f32 %v1291, %v517
        %v1308 = vadd.f32 %v1292, %v518
        %v1309 = vadd.f32 %v1293, %v519
        %s1310 = sld [smem:[#allocation2 + $0x1]]
        %v1311 = vld [vmem:[%s8 + $0x28] sm:$0xff]
        %v1312 = vld [vmem:[%s8 + $0x30] sm:$0xff]
        %v1313 = vld [vmem:[%s8 + $0x38] sm:$0xff]
        %v1314 = vld [vmem:[%s8 + $0x40] sm:$0xff]
        %v1315 = vpack.c.bf16 %v1312, %v1311
        %v1316 = vpack.c.bf16 %v1314, %v1313
        %v1317 = vld [vmem:[%s8 + $0x48] sm:$0x1]
        %v1318 = vld [vmem:[%s7 + $0x60] sm:$0xff]
        %v1319 = vld [vmem:[%s7 + $0x68] sm:$0xff]
        %v1320 = vld [vmem:[%s7 + $0x70] sm:$0xff]
        %v1321 = vld [vmem:[%s7 + $0x78] sm:$0xff]
        %v1322 = vld [vmem:[%s7 + $0x80] sm:$0xff]
        %v1323 = vld [vmem:[%s7 + $0x88] sm:$0xff]
        %v1324 = vld [vmem:[%s7 + $0x90] sm:$0xff]
        %v1325 = vld [vmem:[%s7 + $0x98] sm:$0xff]
        %v1326 = vpack.c.bf16 %v1319, %v1318
        %v1327 = vpack.c.bf16 %v1321, %v1320
        %v1328 = vpack.c.bf16 %v1323, %v1322
        %v1329 = vpack.c.bf16 %v1325, %v1324
        %v1330 = vld [vmem:[%s7 + $0xa0] sm:$0x1]
        %v1331 = vpack.c.bf16 %v1295, %v1294
        %v1332 = vpack.c.bf16 %v1297, %v1296
        %v1333 = vpack.c.bf16 %v1299, %v1298
        %v1334 = vpack.c.bf16 %v1301, %v1300
        %v1335 = vpack.c.bf16 %v1303, %v1302
        %v1336 = vpack.c.bf16 %v1305, %v1304
        %v1337 = vpack.c.bf16 %v1307, %v1306
        %v1338 = vpack.c.bf16 %v1309, %v1308
        %1339 = vmatprep.subr.bf16.mxu0 0
        %1340 = vmatpush1.bf16.msra.mxu0 %v1331
        %1341 = vmatprep.subr.bf16.mxu0 0
        %1342 = vmatpush1.bf16.msra.mxu0 %v1332
        %1343 = vmatprep.subr.bf16.mxu0 0
        %1344 = vmatpush1.bf16.msra.mxu0 %v1333
        %1345 = vmatprep.subr.bf16.mxu0 0
        %1346 = vmatpush1.bf16.msra.mxu0 %v1334
        %1347 = vmatprep.subr.bf16.mxu0 0
        %1348 = vmatpush1.bf16.msra.mxu0 %v1335
        %1349 = vmatprep.subr.bf16.mxu0 0
        %1350 = vmatpush1.bf16.msra.mxu0 %v1336
        %1351 = vmatprep.subr.bf16.mxu0 0
        %1352 = vmatpush1.bf16.msra.mxu0 %v1337
        %1353 = vmatprep.subr.bf16.mxu0 0
        %1354 = vmatpush1.bf16.msra.mxu0 %v1338
        %1355 = vmatprep.subr.bf16.mxu0 0
        %1356 = vmatpush1.bf16.msra.mxu0 0
        %1357 = vmatprep.subr.bf16.mxu0 0
        %1358 = vmatpush1.bf16.msra.mxu0 0
        %1359 = vmatprep.subr.bf16.mxu0 0
        %1360 = vmatpush1.bf16.msra.mxu0 0
        %1361 = vmatprep.subr.bf16.mxu0 0
        %1362 = vmatpush1.bf16.msra.mxu0 0
        %1363 = vmatprep.subr.bf16.mxu0 0
        %1364 = vmatpush1.bf16.msra.mxu0 0
        %1365 = vmatprep.subr.bf16.mxu0 0
        %1366 = vmatpush1.bf16.msra.mxu0 0
        %1367 = vmatprep.subr.bf16.mxu0 0
        %1368 = vmatpush1.bf16.msra.mxu0 0
        %1369 = vmatprep.subr.bf16.mxu0 0
        %1370 = vmatpush1.bf16.msra.mxu0 0
        %1371 = vmatprep.mubr.bf16.mxu0 0
        %1372 = vmatmul.mubr.bf16.gmra.mrb[0].mxu0 %v847
        %v1373 = vpop.f32.mrb[0].mxu0
        %v1374 = vadd.f32 %v724, %v1373
        %v1375 = vpop.f32.mrb[0].mxu0
        %v1376 = vpop.f32.mrb[0].mxu0
        %v1377 = vadd.f32 %v727, %v1376
        %v1378 = vpop.f32.mrb[0].mxu0
        %1379 = vmatprep.mubr.bf16.mxu0 0
        %1380 = vmatmul.mubr.bf16.gmra.mrb[0].mxu0 %v848
        %v1381 = vpop.f32.mrb[0].mxu0
        %v1382 = vadd.f32 %v732, %v1381
        %v1383 = vpop.f32.mrb[0].mxu0
        %v1384 = vpop.f32.mrb[0].mxu0
        %v1385 = vadd.f32 %v735, %v1384
        %v1386 = vpop.f32.mrb[0].mxu0
        %1387 = vmatprep.mubr.bf16.mxu0 0
        %1388 = vmatmul.mubr.bf16.gmra.mrb[0].mxu0 %v849
        %v1389 = vpop.f32.mrb[0].mxu0
        %v1390 = vadd.f32 %v740, %v1389
        %v1391 = vpop.f32.mrb[0].mxu0
        %v1392 = vpop.f32.mrb[0].mxu0
        %v1393 = vadd.f32 %v743, %v1392
        %v1394 = vpop.f32.mrb[0].mxu0
        %1395 = vmatprep.mubr.bf16.mxu0 0
        %1396 = vmatmul.mubr.bf16.gmra.mrb[0].mxu0 %v850
        %v1397 = vpop.f32.mrb[0].mxu0
        %v1398 = vadd.f32 %v748, %v1397
        %v1399 = vpop.f32.mrb[0].mxu0
        %v1400 = vpop.f32.mrb[0].mxu0
        %v1401 = vadd.f32 %v751, %v1400
        %v1402 = vpop.f32.mrb[0].mxu0
        %1403 = vmatprep.mubr.bf16.mxu0 0
        %1404 = vmatmul.mubr.bf16.gmra.mrb[0].mxu0 %v851
        %v1405 = vpop.f32.mrb[0].mxu0
        %v1406 = vadd.f32 %v756, %v1405
        %v1407 = vpop.f32.mrb[0].mxu0
        %v1408 = vpop.f32.mrb[0].mxu0
        %v1409 = vadd.f32 %v759, %v1408
        %v1410 = vpop.f32.mrb[0].mxu0
        %1411 = vmatprep.mubr.bf16.mxu0 0
        %1412 = vmatmul.mubr.bf16.gmra.mrb[0].mxu0 %v852
        %v1413 = vpop.f32.mrb[0].mxu0
        %v1414 = vadd.f32 %v764, %v1413
        %v1415 = vpop.f32.mrb[0].mxu0
        %v1416 = vpop.f32.mrb[0].mxu0
        %v1417 = vadd.f32 %v767, %v1416
        %v1418 = vpop.f32.mrb[0].mxu0
        %1419 = vmatprep.mubr.bf16.mxu0 0
        %1420 = vmatmul.mubr.bf16.gmra.mrb[0].mxu0 %v853
        %v1421 = vpop.f32.mrb[0].mxu0
        %v1422 = vadd.f32 %v772, %v1421
        %v1423 = vpop.f32.mrb[0].mxu0
        %v1424 = vpop.f32.mrb[0].mxu0
        %v1425 = vadd.f32 %v775, %v1424
        %v1426 = vpop.f32.mrb[0].mxu0
        %1427 = vmatprep.mubr.bf16.mxu0 0
        %1428 = vmatmul.mubr.bf16.gmra.mrb[0].mxu0 %v854
        %v1429 = vpop.f32.mrb[0].mxu0
        %v1430 = vadd.f32 %v780, %v1429
        %v1431 = vpop.f32.mrb[0].mxu0
        %v1432 = vpop.f32.mrb[0].mxu0
        %v1433 = vadd.f32 %v783, %v1432
        %v1434 = vpop.f32.mrb[0].mxu0
        %1435 = vdwg.mxu0
        %s1436 = sadd.f32 %s1310, 1.0
        %v1437 = vstv %s1436
        %v1438 = vmul.f32 %v1437, %v1294
        %v1439 = vmul.f32 %v1437, %v1295
        %v1440 = vmul.f32 %v1437, %v1296
        %v1441 = vmul.f32 %v1437, %v1297
        %v1442 = vmul.f32 %v1437, %v1298
        %v1443 = vmul.f32 %v1437, %v1299
        %v1444 = vmul.f32 %v1437, %v1300
        %v1445 = vmul.f32 %v1437, %v1301
        %v1446 = vmul.f32 %v1437, %v1302
        %v1447 = vmul.f32 %v1437, %v1303
        %v1448 = vmul.f32 %v1437, %v1304
        %v1449 = vmul.f32 %v1437, %v1305
        %v1450 = vmul.f32 %v1437, %v1306
        %v1451 = vmul.f32 %v1437, %v1307
        %v1452 = vmul.f32 %v1437, %v1308
        %v1453 = vmul.f32 %v1437, %v1309
        %v1454 = vadd.f32 %v1438, %v1374
        %v1455 = vadd.f32 %v1439, %v1377
        %v1456 = vadd.f32 %v1440, %v1382
        %v1457 = vadd.f32 %v1441, %v1385
        %v1458 = vadd.f32 %v1442, %v1390
        %v1459 = vadd.f32 %v1443, %v1393
        %v1460 = vadd.f32 %v1444, %v1398
        %v1461 = vadd.f32 %v1445, %v1401
        %v1462 = vadd.f32 %v1446, %v1406
        %v1463 = vadd.f32 %v1447, %v1409
        %v1464 = vadd.f32 %v1448, %v1414
        %v1465 = vadd.f32 %v1449, %v1417
        %v1466 = vadd.f32 %v1450, %v1422
        %v1467 = vadd.f32 %v1451, %v1425
        %v1468 = vadd.f32 %v1452, %v1430
        %v1469 = vadd.f32 %v1453, %v1433
        %v1470 = vpack.c.bf16 %v1455, %v1454
        %v1471 = vpack.c.bf16 %v1457, %v1456
        %v1472 = vpack.c.bf16 %v1459, %v1458
        %v1473 = vpack.c.bf16 %v1461, %v1460
        %v1474 = vpack.c.bf16 %v1463, %v1462
        %v1475 = vpack.c.bf16 %v1465, %v1464
        %v1476 = vpack.c.bf16 %v1467, %v1466
        %v1477 = vpack.c.bf16 %v1469, %v1468
        %v1478 = vlaneseq
        %v1479 = vshrl.u32 %v1478, 7
        %v1480 = vsub.s32 0, %v1479
        %v1481 = vrot.slane %v1317, %v1480
        %v1483 = vsel %vm1006, %v1470, 0
        %v1486 = vsel %vm1006, %v1471, 0
        %v1489 = vsel %vm1006, %v1472, 0
        %v1492 = vsel %vm1006, %v1473, 0
        %v1495 = vsel %vm1006, %v1474, 0
        %v1498 = vsel %vm1006, %v1475, 0
        %v1501 = vsel %vm1006, %v1476, 0
        %v1504 = vsel %vm1006, %v1477, 0
        %1506 = vmatprep.subr.bf16.mxu0 0
        %1507 = vmatpush1.bf16.msra.mxu0 %v1315
        %1508 = vmatprep.subr.bf16.mxu0 0
        %1509 = vmatpush1.bf16.msra.mxu0 %v1316
        %1510 = vmatprep.subr.bf16.mxu0 0
        %1511 = vmatpush1.bf16.msra.mxu0 0
        %1512 = vmatprep.subr.bf16.mxu0 0
        %1513 = vmatpush1.bf16.msra.mxu0 0
        %1514 = vmatprep.subr.bf16.mxu0 0
        %1515 = vmatpush1.bf16.msra.mxu0 0
        %1516 = vmatprep.subr.bf16.mxu0 0
        %1517 = vmatpush1.bf16.msra.mxu0 0
        %1518 = vmatprep.subr.bf16.mxu0 0
        %1519 = vmatpush1.bf16.msra.mxu0 0
        %1520 = vmatprep.subr.bf16.mxu0 0
        %1521 = vmatpush1.bf16.msra.mxu0 0
        %1522 = vmatprep.subr.bf16.mxu0 0
        %1523 = vmatpush1.bf16.msra.mxu0 0
        %1524 = vmatprep.subr.bf16.mxu0 0
        %1525 = vmatpush1.bf16.msra.mxu0 0
        %1526 = vmatprep.subr.bf16.mxu0 0
        %1527 = vmatpush1.bf16.msra.mxu0 0
        %1528 = vmatprep.subr.bf16.mxu0 0
        %1529 = vmatpush1.bf16.msra.mxu0 0
        %1530 = vmatprep.subr.bf16.mxu0 0
        %1531 = vmatpush1.bf16.msra.mxu0 0
        %1532 = vmatprep.subr.bf16.mxu0 0
        %1533 = vmatpush1.bf16.msra.mxu0 0
        %1534 = vmatprep.subr.bf16.mxu0 0
        %1535 = vmatpush1.bf16.msra.mxu0 0
        %1536 = vmatprep.subr.bf16.mxu0 0
        %1537 = vmatpush1.bf16.msra.mxu0 0
        %1538 = vmatprep.mubr.bf16.mxu0 0
        %1539 = vmatmul.mubr.bf16.gmra.mrb[0].mxu0 %v1483
        %v1540 = vpop.f32.mrb[0].mxu0
        %v1541 = vadd.f32 %v1481, %v1540
        %v1542 = vpop.f32.mrb[0].mxu0
        %v1543 = vpop.f32.mrb[0].mxu0
        %v1544 = vadd.f32 %v1481, %v1543
        %v1545 = vpop.f32.mrb[0].mxu0
        %1546 = vmatprep.mubr.bf16.mxu0 0
        %1547 = vmatmul.mubr.bf16.gmra.mrb[0].mxu0 %v1486
        %v1548 = vpop.f32.mrb[0].mxu0
        %v1549 = vadd.f32 %v1481, %v1548
        %v1550 = vpop.f32.mrb[0].mxu0
        %v1551 = vpop.f32.mrb[0].mxu0
        %v1552 = vadd.f32 %v1481, %v1551
        %v1553 = vpop.f32.mrb[0].mxu0
        %1554 = vmatprep.mubr.bf16.mxu0 0
        %1555 = vmatmul.mubr.bf16.gmra.mrb[0].mxu0 %v1489
        %v1556 = vpop.f32.mrb[0].mxu0
        %v1557 = vadd.f32 %v1481, %v1556
        %v1558 = vpop.f32.mrb[0].mxu0
        %v1559 = vpop.f32.mrb[0].mxu0
        %v1560 = vadd.f32 %v1481, %v1559
        %v1561 = vpop.f32.mrb[0].mxu0
        %1562 = vmatprep.mubr.bf16.mxu0 0
        %1563 = vmatmul.mubr.bf16.gmra.mrb[0].mxu0 %v1492
        %v1564 = vpop.f32.mrb[0].mxu0
        %v1565 = vadd.f32 %v1481, %v1564
        %v1566 = vpop.f32.mrb[0].mxu0
        %v1567 = vpop.f32.mrb[0].mxu0
        %v1568 = vadd.f32 %v1481, %v1567
        %v1569 = vpop.f32.mrb[0].mxu0
        %1570 = vmatprep.mubr.bf16.mxu0 0
        %1571 = vmatmul.mubr.bf16.gmra.mrb[0].mxu0 %v1495
        %v1572 = vpop.f32.mrb[0].mxu0
        %v1573 = vadd.f32 %v1481, %v1572
        %v1574 = vpop.f32.mrb[0].mxu0
        %v1575 = vpop.f32.mrb[0].mxu0
        %v1576 = vadd.f32 %v1481, %v1575
        %v1577 = vpop.f32.mrb[0].mxu0
        %1578 = vmatprep.mubr.bf16.mxu0 0
        %1579 = vmatmul.mubr.bf16.gmra.mrb[0].mxu0 %v1498
        %v1580 = vpop.f32.mrb[0].mxu0
        %v1581 = vadd.f32 %v1481, %v1580
        %v1582 = vpop.f32.mrb[0].mxu0
        %v1583 = vpop.f32.mrb[0].mxu0
        %v1584 = vadd.f32 %v1481, %v1583
        %v1585 = vpop.f32.mrb[0].mxu0
        %1586 = vmatprep.mubr.bf16.mxu0 0
        %1587 = vmatmul.mubr.bf16.gmra.mrb[0].mxu0 %v1501
        %v1588 = vpop.f32.mrb[0].mxu0
        %v1589 = vadd.f32 %v1481, %v1588
        %v1590 = vpop.f32.mrb[0].mxu0
        %v1591 = vpop.f32.mrb[0].mxu0
        %v1592 = vadd.f32 %v1481, %v1591
        %v1593 = vpop.f32.mrb[0].mxu0
        %1594 = vmatprep.mubr.bf16.mxu0 0
        %1595 = vmatmul.mubr.bf16.gmra.mrb[0].mxu0 %v1504
        %v1596 = vpop.f32.mrb[0].mxu0
        %v1597 = vadd.f32 %v1481, %v1596
        %v1598 = vpop.f32.mrb[0].mxu0
        %v1599 = vpop.f32.mrb[0].mxu0
        %v1600 = vadd.f32 %v1481, %v1599
        %v1601 = vpop.f32.mrb[0].mxu0
        %1602 = vdwg.mxu0
        %v1603 = vmax.f32 %v1541, 0.0
        %v1604 = vmax.f32 %v1544, 0.0
        %v1605 = vmax.f32 %v1549, 0.0
        %v1606 = vmax.f32 %v1552, 0.0
        %v1607 = vmax.f32 %v1557, 0.0
        %v1608 = vmax.f32 %v1560, 0.0
        %v1609 = vmax.f32 %v1565, 0.0
        %v1610 = vmax.f32 %v1568, 0.0
        %v1611 = vmax.f32 %v1573, 0.0
        %v1612 = vmax.f32 %v1576, 0.0
        %v1613 = vmax.f32 %v1581, 0.0
        %v1614 = vmax.f32 %v1584, 0.0
        %v1615 = vmax.f32 %v1589, 0.0
        %v1616 = vmax.f32 %v1592, 0.0
        %v1617 = vmax.f32 %v1597, 0.0
        %v1618 = vmax.f32 %v1600, 0.0
        %v1619 = vpack.c.bf16 %v1604, %v1603
        %v1620 = vpack.c.bf16 %v1606, %v1605
        %v1621 = vpack.c.bf16 %v1608, %v1607
        %v1622 = vpack.c.bf16 %v1610, %v1609
        %v1623 = vpack.c.bf16 %v1612, %v1611
        %v1624 = vpack.c.bf16 %v1614, %v1613
        %v1625 = vpack.c.bf16 %v1616, %v1615
        %v1626 = vpack.c.bf16 %v1618, %v1617
        %v1627 = vlaneseq
        %v1628 = vshrl.u32 %v1627, 7
        %v1629 = vsub.s32 0, %v1628
        %v1630 = vrot.slane %v1330, %v1629
        %v1632 = vsel %vm1156, %v1619, 0
        %v1635 = vsel %vm1156, %v1620, 0
        %v1638 = vsel %vm1156, %v1621, 0
        %v1641 = vsel %vm1156, %v1622, 0
        %v1644 = vsel %vm1156, %v1623, 0
        %v1647 = vsel %vm1156, %v1624, 0
        %v1650 = vsel %vm1156, %v1625, 0
        %v1653 = vsel %vm1156, %v1626, 0
        %1655 = vmatprep.subr.bf16.mxu0 0
        %1656 = vmatpush1.bf16.msra.mxu0 %v1326
        %1657 = vmatprep.subr.bf16.mxu0 0
        %1658 = vmatpush1.bf16.msra.mxu0 %v1327
        %1659 = vmatprep.subr.bf16.mxu0 0
        %1660 = vmatpush1.bf16.msra.mxu0 %v1328
        %1661 = vmatprep.subr.bf16.mxu0 0
        %1662 = vmatpush1.bf16.msra.mxu0 %v1329
        %1663 = vmatprep.subr.bf16.mxu0 0
        %1664 = vmatpush1.bf16.msra.mxu0 0
        %1665 = vmatprep.subr.bf16.mxu0 0
        %1666 = vmatpush1.bf16.msra.mxu0 0
        %1667 = vmatprep.subr.bf16.mxu0 0
        %1668 = vmatpush1.bf16.msra.mxu0 0
        %1669 = vmatprep.subr.bf16.mxu0 0
        %1670 = vmatpush1.bf16.msra.mxu0 0
        %1671 = vmatprep.subr.bf16.mxu0 0
        %1672 = vmatpush1.bf16.msra.mxu0 0
        %1673 = vmatprep.subr.bf16.mxu0 0
        %1674 = vmatpush1.bf16.msra.mxu0 0
        %1675 = vmatprep.subr.bf16.mxu0 0
        %1676 = vmatpush1.bf16.msra.mxu0 0
        %1677 = vmatprep.subr.bf16.mxu0 0
        %1678 = vmatpush1.bf16.msra.mxu0 0
        %1679 = vmatprep.subr.bf16.mxu0 0
        %1680 = vmatpush1.bf16.msra.mxu0 0
        %1681 = vmatprep.subr.bf16.mxu0 0
        %1682 = vmatpush1.bf16.msra.mxu0 0
        %1683 = vmatprep.subr.bf16.mxu0 0
        %1684 = vmatpush1.bf16.msra.mxu0 0
        %1685 = vmatprep.subr.bf16.mxu0 0
        %1686 = vmatpush1.bf16.msra.mxu0 0
        %1687 = vmatprep.mubr.bf16.mxu0 0
        %1688 = vmatmul.mubr.bf16.gmra.mrb[0].mxu0 %v1632
        %v1689 = vpop.f32.mrb[0].mxu0
        %v1690 = vadd.f32 %v1630, %v1689
        %v1691 = vpop.f32.mrb[0].mxu0
        %v1692 = vpop.f32.mrb[0].mxu0
        %v1693 = vadd.f32 %v1630, %v1692
        %v1694 = vpop.f32.mrb[0].mxu0
        %1695 = vmatprep.mubr.bf16.mxu0 0
        %1696 = vmatmul.mubr.bf16.gmra.mrb[0].mxu0 %v1635
        %v1697 = vpop.f32.mrb[0].mxu0
        %v1698 = vadd.f32 %v1630, %v1697
        %v1699 = vpop.f32.mrb[0].mxu0
        %v1700 = vpop.f32.mrb[0].mxu0
        %v1701 = vadd.f32 %v1630, %v1700
        %v1702 = vpop.f32.mrb[0].mxu0
        %1703 = vmatprep.mubr.bf16.mxu0 0
        %1704 = vmatmul.mubr.bf16.gmra.mrb[0].mxu0 %v1638
        %v1705 = vpop.f32.mrb[0].mxu0
        %v1706 = vadd.f32 %v1630, %v1705
        %v1707 = vpop.f32.mrb[0].mxu0
        %v1708 = vpop.f32.mrb[0].mxu0
        %v1709 = vadd.f32 %v1630, %v1708
        %v1710 = vpop.f32.mrb[0].mxu0
        %1711 = vmatprep.mubr.bf16.mxu0 0
        %1712 = vmatmul.mubr.bf16.gmra.mrb[0].mxu0 %v1641
        %v1713 = vpop.f32.mrb[0].mxu0
        %v1714 = vadd.f32 %v1630, %v1713
        %v1715 = vpop.f32.mrb[0].mxu0
        %v1716 = vpop.f32.mrb[0].mxu0
        %v1717 = vadd.f32 %v1630, %v1716
        %v1718 = vpop.f32.mrb[0].mxu0
        %1719 = vmatprep.mubr.bf16.mxu0 0
        %1720 = vmatmul.mubr.bf16.gmra.mrb[0].mxu0 %v1644
        %v1721 = vpop.f32.mrb[0].mxu0
        %v1722 = vadd.f32 %v1630, %v1721
        %v1723 = vpop.f32.mrb[0].mxu0
        %v1724 = vpop.f32.mrb[0].mxu0
        %v1725 = vadd.f32 %v1630, %v1724
        %v1726 = vpop.f32.mrb[0].mxu0
        %1727 = vmatprep.mubr.bf16.mxu0 0
        %1728 = vmatmul.mubr.bf16.gmra.mrb[0].mxu0 %v1647
        %v1729 = vpop.f32.mrb[0].mxu0
        %v1730 = vadd.f32 %v1630, %v1729
        %v1731 = vpop.f32.mrb[0].mxu0
        %v1732 = vpop.f32.mrb[0].mxu0
        %v1733 = vadd.f32 %v1630, %v1732
        %v1734 = vpop.f32.mrb[0].mxu0
        %1735 = vmatprep.mubr.bf16.mxu0 0
        %1736 = vmatmul.mubr.bf16.gmra.mrb[0].mxu0 %v1650
        %v1737 = vpop.f32.mrb[0].mxu0
        %v1738 = vadd.f32 %v1630, %v1737
        %v1739 = vpop.f32.mrb[0].mxu0
        %v1740 = vpop.f32.mrb[0].mxu0
        %v1741 = vadd.f32 %v1630, %v1740
        %v1742 = vpop.f32.mrb[0].mxu0
        %1743 = vmatprep.mubr.bf16.mxu0 0
        %1744 = vmatmul.mubr.bf16.gmra.mrb[0].mxu0 %v1653
        %v1745 = vpop.f32.mrb[0].mxu0
        %v1746 = vadd.f32 %v1630, %v1745
        %v1747 = vpop.f32.mrb[0].mxu0
        %v1748 = vpop.f32.mrb[0].mxu0
        %v1749 = vadd.f32 %v1630, %v1748
        %v1750 = vpop.f32.mrb[0].mxu0
        %1751 = vdwg.mxu0
        %v1752 = vmax.f32 %v1690, 0.0
        %v1753 = vmax.f32 %v1693, 0.0
        %v1754 = vmax.f32 %v1698, 0.0
        %v1755 = vmax.f32 %v1701, 0.0
        %v1756 = vmax.f32 %v1706, 0.0
        %v1757 = vmax.f32 %v1709, 0.0
        %v1758 = vmax.f32 %v1714, 0.0
        %v1759 = vmax.f32 %v1717, 0.0
        %v1760 = vmax.f32 %v1722, 0.0
        %v1761 = vmax.f32 %v1725, 0.0
        %v1762 = vmax.f32 %v1730, 0.0
        %v1763 = vmax.f32 %v1733, 0.0
        %v1764 = vmax.f32 %v1738, 0.0
        %v1765 = vmax.f32 %v1741, 0.0
        %v1766 = vmax.f32 %v1746, 0.0
        %v1767 = vmax.f32 %v1749, 0.0
        %v1768 = vadd.f32 %v1752, %v1294
        %v1769 = vadd.f32 %v1753, %v1295
        %v1770 = vadd.f32 %v1754, %v1296
        %v1771 = vadd.f32 %v1755, %v1297
        %v1772 = vadd.f32 %v1756, %v1298
        %v1773 = vadd.f32 %v1757, %v1299
        %v1774 = vadd.f32 %v1758, %v1300
        %v1775 = vadd.f32 %v1759, %v1301
        %v1776 = vadd.f32 %v1760, %v1302
        %v1777 = vadd.f32 %v1761, %v1303
        %v1778 = vadd.f32 %v1762, %v1304
        %v1779 = vadd.f32 %v1763, %v1305
        %v1780 = vadd.f32 %v1764, %v1306
        %v1781 = vadd.f32 %v1765, %v1307
        %v1782 = vadd.f32 %v1766, %v1308
        %v1783 = vadd.f32 %v1767, %v1309
        %v1784 = vld [vmem:[%s8 + $0x50] sm:$0xff]
        %v1785 = vld [vmem:[%s8 + $0x58] sm:$0xff]
        %v1786 = vld [vmem:[%s8 + $0x60] sm:$0xff]
        %v1787 = vld [vmem:[%s8 + $0x68] sm:$0xff]
        %v1788 = vpack.c.bf16 %v1785, %v1784
        %v1789 = vpack.c.bf16 %v1787, %v1786
        %v1790 = vld [vmem:[%s8 + $0x70] sm:$0x7]
        %v1791 = vld [vmem:[%s8 + $0x78] sm:$0x1]
        %v1792 = vld [vmem:[%s8 + $0x80] sm:$0x1]
        %v1793 = vld [vmem:[%s8 + $0x88] sm:$0xff]
        %v1794 = vld [vmem:[%s8 + $0x90] sm:$0xff]
        %v1795 = vld [vmem:[%s8 + $0x98] sm:$0xff]
        %v1796 = vld [vmem:[%s8 + $0xa0] sm:$0xff]
        %v1797 = vld [vmem:[%s8 + $0xa8] sm:$0xff]
        %v1798 = vld [vmem:[%s8 + $0xb0] sm:$0xff]
        %v1799 = vld [vmem:[%s8 + $0xb8] sm:$0xff]
        %v1800 = vld [vmem:[%s8 + $0xc0] sm:$0xff]
        %v1801 = vpack.c.bf16 %v1794, %v1793
        %v1802 = vpack.c.bf16 %v1796, %v1795
        %v1803 = vpack.c.bf16 %v1798, %v1797
        %v1804 = vpack.c.bf16 %v1800, %v1799
        %v1805 = vld [vmem:[%s8 + $0xc8] sm:$0x1]
        %v1806 = vld [vmem:[%s9] sm:$0xff]
        %v1807 = vld [vmem:[%s9 + $0x8] sm:$0xff]
        %v1808 = vld [vmem:[%s9 + $0x10] sm:$0xff]
        %v1809 = vld [vmem:[%s9 + $0x18] sm:$0xff]
        %v1810 = vld [vmem:[%s9 + $0x20] sm:$0xff]
        %v1811 = vld [vmem:[%s9 + $0x28] sm:$0xff]
        %v1812 = vld [vmem:[%s9 + $0x30] sm:$0xff]
        %v1813 = vld [vmem:[%s9 + $0x38] sm:$0xff]
        %v1814 = vpack.c.bf16 %v1807, %v1806
        %v1815 = vpack.c.bf16 %v1809, %v1808
        %v1816 = vpack.c.bf16 %v1811, %v1810
        %v1817 = vpack.c.bf16 %v1813, %v1812
        %v1818 = vld [vmem:[%s9 + $0x40] sm:$0x1]
        %v1819 = vpack.c.bf16 %v1769, %v1768
        %v1820 = vpack.c.bf16 %v1771, %v1770
        %v1821 = vpack.c.bf16 %v1773, %v1772
        %v1822 = vpack.c.bf16 %v1775, %v1774
        %v1823 = vpack.c.bf16 %v1777, %v1776
        %v1824 = vpack.c.bf16 %v1779, %v1778
        %v1825 = vpack.c.bf16 %v1781, %v1780
        %v1826 = vpack.c.bf16 %v1783, %v1782
        %v1827 = vld [vmem:[%s473] sm:$0xff]
        %v1828 = vld [vmem:[%s473 + $0x8] sm:$0xff]
        %v1829 = vld [vmem:[%s473 + $0x10] sm:$0xff]
        %v1830 = vld [vmem:[%s473 + $0x18] sm:$0xff]
        %v1831 = vld [vmem:[%s473 + $0x20] sm:$0xff]
        %v1832 = vld [vmem:[%s473 + $0x28] sm:$0xff]
        %v1833 = vld [vmem:[%s473 + $0x30] sm:$0xff]
        %v1834 = vld [vmem:[%s473 + $0x38] sm:$0xff]
        %v1835 = vld [vmem:[%s473 + $0x40] sm:$0xff]
        %v1836 = vld [vmem:[%s473 + $0x48] sm:$0xff]
        %v1837 = vld [vmem:[%s473 + $0x50] sm:$0xff]
        %v1838 = vld [vmem:[%s473 + $0x58] sm:$0xff]
        %v1839 = vld [vmem:[%s473 + $0x60] sm:$0xff]
        %v1840 = vld [vmem:[%s473 + $0x68] sm:$0xff]
        %v1841 = vld [vmem:[%s473 + $0x70] sm:$0xff]
        %v1842 = vld [vmem:[%s473 + $0x78] sm:$0xff]
        %1844 = vset.pattern.permute.xlu0 0
        %1845 = vperm.xlu0 %1844, %v1827
        %v1846 = vpop.permute.xlu0 %1845
        %1849 = vset.pattern.permute.xlu0 0
        %1850 = vperm.xlu0 %1849, %v1828
        %v1851 = vpop.permute.xlu0 %1850
        %1854 = vset.pattern.permute.xlu0 0
        %1855 = vperm.xlu0 %1854, %v1829
        %v1856 = vpop.permute.xlu0 %1855
        %1859 = vset.pattern.permute.xlu0 0
        %1860 = vperm.xlu0 %1859, %v1830
        %v1861 = vpop.permute.xlu0 %1860
        %1864 = vset.pattern.permute.xlu0 0
        %1865 = vperm.xlu0 %1864, %v1831
        %v1866 = vpop.permute.xlu0 %1865
        %1869 = vset.pattern.permute.xlu0 0
        %1870 = vperm.xlu0 %1869, %v1832
        %v1871 = vpop.permute.xlu0 %1870
        %1874 = vset.pattern.permute.xlu0 0
        %1875 = vperm.xlu0 %1874, %v1833
        %v1876 = vpop.permute.xlu0 %1875
        %1879 = vset.pattern.permute.xlu0 0
        %1880 = vperm.xlu0 %1879, %v1834
        %v1881 = vpop.permute.xlu0 %1880
        %1884 = vset.pattern.permute.xlu0 0
        %1885 = vperm.xlu0 %1884, %v1835
        %v1886 = vpop.permute.xlu0 %1885
        %1889 = vset.pattern.permute.xlu0 0
        %1890 = vperm.xlu0 %1889, %v1836
        %v1891 = vpop.permute.xlu0 %1890
        %1894 = vset.pattern.permute.xlu0 0
        %1895 = vperm.xlu0 %1894, %v1837
        %v1896 = vpop.permute.xlu0 %1895
        %1899 = vset.pattern.permute.xlu0 0
        %1900 = vperm.xlu0 %1899, %v1838
        %v1901 = vpop.permute.xlu0 %1900
        %1904 = vset.pattern.permute.xlu0 0
        %1905 = vperm.xlu0 %1904, %v1839
        %v1906 = vpop.permute.xlu0 %1905
        %1909 = vset.pattern.permute.xlu0 0
        %1910 = vperm.xlu0 %1909, %v1840
        %v1911 = vpop.permute.xlu0 %1910
        %1914 = vset.pattern.permute.xlu0 0
        %1915 = vperm.xlu0 %1914, %v1841
        %v1916 = vpop.permute.xlu0 %1915
        %1919 = vset.pattern.permute.xlu0 0
        %1920 = vperm.xlu0 %1919, %v1842
        %v1921 = vpop.permute.xlu0 %1920
        %v1923 = vlaneseq
        %v1924 = vshrl.u32 %v1923, 7
        %v1925 = vsub.s32 0, %v1924
        %v1926 = vrot.slane %v1790, %v1925
        %v1927 = vmul.f32 %v1846, %v1926
        %v1928 = vmul.f32 %v1851, %v1926
        %v1929 = vmul.f32 %v1856, %v1926
        %v1930 = vmul.f32 %v1861, %v1926
        %v1931 = vmul.f32 %v1866, %v1926
        %v1932 = vmul.f32 %v1871, %v1926
        %v1933 = vmul.f32 %v1876, %v1926
        %v1934 = vmul.f32 %v1881, %v1926
        %v1935 = vmul.f32 %v1886, %v1926
        %v1936 = vmul.f32 %v1891, %v1926
        %v1937 = vmul.f32 %v1896, %v1926
        %v1938 = vmul.f32 %v1901, %v1926
        %v1939 = vmul.f32 %v1906, %v1926
        %v1940 = vmul.f32 %v1911, %v1926
        %v1941 = vmul.f32 %v1916, %v1926
        %v1942 = vmul.f32 %v1921, %v1926
        %v1944 = vsel %vm1006, %v1819, 0
        %v1947 = vsel %vm1006, %v1820, 0
        %v1950 = vsel %vm1006, %v1821, 0
        %v1953 = vsel %vm1006, %v1822, 0
        %v1956 = vsel %vm1006, %v1823, 0
        %v1959 = vsel %vm1006, %v1824, 0
        %v1962 = vsel %vm1006, %v1825, 0
        %v1965 = vsel %vm1006, %v1826, 0
        %1967 = vmatprep.subr.bf16.mxu0 0
        %1968 = vmatpush1.bf16.msra.mxu0 %v1788
        %1969 = vmatprep.subr.bf16.mxu0 0
        %1970 = vmatpush1.bf16.msra.mxu0 %v1789
        %1971 = vmatprep.subr.bf16.mxu0 0
        %1972 = vmatpush1.bf16.msra.mxu0 0
        %1973 = vmatprep.subr.bf16.mxu0 0
        %1974 = vmatpush1.bf16.msra.mxu0 0
        %1975 = vmatprep.subr.bf16.mxu0 0
        %1976 = vmatpush1.bf16.msra.mxu0 0
        %1977 = vmatprep.subr.bf16.mxu0 0
        %1978 = vmatpush1.bf16.msra.mxu0 0
        %1979 = vmatprep.subr.bf16.mxu0 0
        %1980 = vmatpush1.bf16.msra.mxu0 0
        %1981 = vmatprep.subr.bf16.mxu0 0
        %1982 = vmatpush1.bf16.msra.mxu0 0
        %1983 = vmatprep.subr.bf16.mxu0 0
        %1984 = vmatpush1.bf16.msra.mxu0 0
        %1985 = vmatprep.subr.bf16.mxu0 0
        %1986 = vmatpush1.bf16.msra.mxu0 0
        %1987 = vmatprep.subr.bf16.mxu0 0
        %1988 = vmatpush1.bf16.msra.mxu0 0
        %1989 = vmatprep.subr.bf16.mxu0 0
        %1990 = vmatpush1.bf16.msra.mxu0 0
        %1991 = vmatprep.subr.bf16.mxu0 0
        %1992 = vmatpush1.bf16.msra.mxu0 0
        %1993 = vmatprep.subr.bf16.mxu0 0
        %1994 = vmatpush1.bf16.msra.mxu0 0
        %1995 = vmatprep.subr.bf16.mxu0 0
        %1996 = vmatpush1.bf16.msra.mxu0 0
        %1997 = vmatprep.subr.bf16.mxu0 0
        %1998 = vmatpush1.bf16.msra.mxu0 0
        %1999 = vmatprep.mubr.bf16.mxu0 0
        %2000 = vmatmul.mubr.bf16.gmra.mrb[0].mxu0 %v1944
        %v2001 = vpop.f32.mrb[0].mxu0
        %v2002 = vadd.f32 %v1927, %v2001
        %v2003 = vpop.f32.mrb[0].mxu0
        %v2004 = vpop.f32.mrb[0].mxu0
        %v2005 = vadd.f32 %v1928, %v2004
        %v2006 = vpop.f32.mrb[0].mxu0
        %2007 = vmatprep.mubr.bf16.mxu0 0
        %2008 = vmatmul.mubr.bf16.gmra.mrb[0].mxu0 %v1947
        %v2009 = vpop.f32.mrb[0].mxu0
        %v2010 = vadd.f32 %v1929, %v2009
        %v2011 = vpop.f32.mrb[0].mxu0
        %v2012 = vpop.f32.mrb[0].mxu0
        %v2013 = vadd.f32 %v1930, %v2012
        %v2014 = vpop.f32.mrb[0].mxu0
        %2015 = vmatprep.mubr.bf16.mxu0 0
        %2016 = vmatmul.mubr.bf16.gmra.mrb[0].mxu0 %v1950
        %v2017 = vpop.f32.mrb[0].mxu0
        %v2018 = vadd.f32 %v1931, %v2017
        %v2019 = vpop.f32.mrb[0].mxu0
        %v2020 = vpop.f32.mrb[0].mxu0
        %v2021 = vadd.f32 %v1932, %v2020
        %v2022 = vpop.f32.mrb[0].mxu0
        %2023 = vmatprep.mubr.bf16.mxu0 0
        %2024 = vmatmul.mubr.bf16.gmra.mrb[0].mxu0 %v1953
        %v2025 = vpop.f32.mrb[0].mxu0
        %v2026 = vadd.f32 %v1933, %v2025
        %v2027 = vpop.f32.mrb[0].mxu0
        %v2028 = vpop.f32.mrb[0].mxu0
        %v2029 = vadd.f32 %v1934, %v2028
        %v2030 = vpop.f32.mrb[0].mxu0
        %2031 = vmatprep.mubr.bf16.mxu0 0
        %2032 = vmatmul.mubr.bf16.gmra.mrb[0].mxu0 %v1956
        %v2033 = vpop.f32.mrb[0].mxu0
        %v2034 = vadd.f32 %v1935, %v2033
        %v2035 = vpop.f32.mrb[0].mxu0
        %v2036 = vpop.f32.mrb[0].mxu0
        %v2037 = vadd.f32 %v1936, %v2036
        %v2038 = vpop.f32.mrb[0].mxu0
        %2039 = vmatprep.mubr.bf16.mxu0 0
        %2040 = vmatmul.mubr.bf16.gmra.mrb[0].mxu0 %v1959
        %v2041 = vpop.f32.mrb[0].mxu0
        %v2042 = vadd.f32 %v1937, %v2041
        %v2043 = vpop.f32.mrb[0].mxu0
        %v2044 = vpop.f32.mrb[0].mxu0
        %v2045 = vadd.f32 %v1938, %v2044
        %v2046 = vpop.f32.mrb[0].mxu0
        %2047 = vmatprep.mubr.bf16.mxu0 0
        %2048 = vmatmul.mubr.bf16.gmra.mrb[0].mxu0 %v1962
        %v2049 = vpop.f32.mrb[0].mxu0
        %v2050 = vadd.f32 %v1939, %v2049
        %v2051 = vpop.f32.mrb[0].mxu0
        %v2052 = vpop.f32.mrb[0].mxu0
        %v2053 = vadd.f32 %v1940, %v2052
        %v2054 = vpop.f32.mrb[0].mxu0
        %2055 = vmatprep.mubr.bf16.mxu0 0
        %2056 = vmatmul.mubr.bf16.gmra.mrb[0].mxu0 %v1965
        %v2057 = vpop.f32.mrb[0].mxu0
        %v2058 = vadd.f32 %v1941, %v2057
        %v2059 = vpop.f32.mrb[0].mxu0
        %v2060 = vpop.f32.mrb[0].mxu0
        %v2061 = vadd.f32 %v1942, %v2060
        %v2062 = vpop.f32.mrb[0].mxu0
        %2063 = vdwg.mxu0
        %2064 = vset.pattern.permute.xlu0 1
        %2065 = vperm.xlu0 %2064, %v1827
        %v2066 = vpop.permute.xlu0 %2065
        %2068 = vset.pattern.permute.xlu0 1
        %2069 = vperm.xlu0 %2068, %v1828
        %v2070 = vpop.permute.xlu0 %2069
        %2072 = vset.pattern.permute.xlu0 1
        %2073 = vperm.xlu0 %2072, %v1829
        %v2074 = vpop.permute.xlu0 %2073
        %2076 = vset.pattern.permute.xlu0 1
        %2077 = vperm.xlu0 %2076, %v1830
        %v2078 = vpop.permute.xlu0 %2077
        %2080 = vset.pattern.permute.xlu0 1
        %2081 = vperm.xlu0 %2080, %v1831
        %v2082 = vpop.permute.xlu0 %2081
        %2084 = vset.pattern.permute.xlu0 1
        %2085 = vperm.xlu0 %2084, %v1832
        %v2086 = vpop.permute.xlu0 %2085
        %2088 = vset.pattern.permute.xlu0 1
        %2089 = vperm.xlu0 %2088, %v1833
        %v2090 = vpop.permute.xlu0 %2089
        %2092 = vset.pattern.permute.xlu0 1
        %2093 = vperm.xlu0 %2092, %v1834
        %v2094 = vpop.permute.xlu0 %2093
        %2096 = vset.pattern.permute.xlu0 1
        %2097 = vperm.xlu0 %2096, %v1835
        %v2098 = vpop.permute.xlu0 %2097
        %2100 = vset.pattern.permute.xlu0 1
        %2101 = vperm.xlu0 %2100, %v1836
        %v2102 = vpop.permute.xlu0 %2101
        %2104 = vset.pattern.permute.xlu0 1
        %2105 = vperm.xlu0 %2104, %v1837
        %v2106 = vpop.permute.xlu0 %2105
        %2108 = vset.pattern.permute.xlu0 1
        %2109 = vperm.xlu0 %2108, %v1838
        %v2110 = vpop.permute.xlu0 %2109
        %2112 = vset.pattern.permute.xlu0 1
        %2113 = vperm.xlu0 %2112, %v1839
        %v2114 = vpop.permute.xlu0 %2113
        %2116 = vset.pattern.permute.xlu0 1
        %2117 = vperm.xlu0 %2116, %v1840
        %v2118 = vpop.permute.xlu0 %2117
        %2120 = vset.pattern.permute.xlu0 1
        %2121 = vperm.xlu0 %2120, %v1841
        %v2122 = vpop.permute.xlu0 %2121
        %2124 = vset.pattern.permute.xlu0 1
        %2125 = vperm.xlu0 %2124, %v1842
        %v2126 = vpop.permute.xlu0 %2125
        %v2128 = vlaneseq
        %v2129 = vshrl.u32 %v2128, 7
        %v2130 = vsub.s32 1, %v2129
        %v2131 = vrot.slane %v1790, %v2130
        %v2132 = vmul.f32 %v2066, %v2131
        %v2133 = vmul.f32 %v2070, %v2131
        %v2134 = vmul.f32 %v2074, %v2131
        %v2135 = vmul.f32 %v2078, %v2131
        %v2136 = vmul.f32 %v2082, %v2131
        %v2137 = vmul.f32 %v2086, %v2131
        %v2138 = vmul.f32 %v2090, %v2131
        %v2139 = vmul.f32 %v2094, %v2131
        %v2140 = vmul.f32 %v2098, %v2131
        %v2141 = vmul.f32 %v2102, %v2131
        %v2142 = vmul.f32 %v2106, %v2131
        %v2143 = vmul.f32 %v2110, %v2131
        %v2144 = vmul.f32 %v2114, %v2131
        %v2145 = vmul.f32 %v2118, %v2131
        %v2146 = vmul.f32 %v2122, %v2131
        %v2147 = vmul.f32 %v2126, %v2131
        %v2148 = vadd.f32 %v2002, %v2132
        %v2149 = vadd.f32 %v2005, %v2133
        %v2150 = vadd.f32 %v2010, %v2134
        %v2151 = vadd.f32 %v2013, %v2135
        %v2152 = vadd.f32 %v2018, %v2136
        %v2153 = vadd.f32 %v2021, %v2137
        %v2154 = vadd.f32 %v2026, %v2138
        %v2155 = vadd.f32 %v2029, %v2139
        %v2156 = vadd.f32 %v2034, %v2140
        %v2157 = vadd.f32 %v2037, %v2141
        %v2158 = vadd.f32 %v2042, %v2142
        %v2159 = vadd.f32 %v2045, %v2143
        %v2160 = vadd.f32 %v2050, %v2144
        %v2161 = vadd.f32 %v2053, %v2145
        %v2162 = vadd.f32 %v2058, %v2146
        %v2163 = vadd.f32 %v2061, %v2147
        %2164 = vset.pattern.permute.xlu0 2
        %2165 = vperm.xlu0 %2164, %v1827
        %v2166 = vpop.permute.xlu0 %2165
        %2168 = vset.pattern.permute.xlu0 2
        %2169 = vperm.xlu0 %2168, %v1828
        %v2170 = vpop.permute.xlu0 %2169
        %2172 = vset.pattern.permute.xlu0 2
        %2173 = vperm.xlu0 %2172, %v1829
        %v2174 = vpop.permute.xlu0 %2173
        %2176 = vset.pattern.permute.xlu0 2
        %2177 = vperm.xlu0 %2176, %v1830
        %v2178 = vpop.permute.xlu0 %2177
        %2180 = vset.pattern.permute.xlu0 2
        %2181 = vperm.xlu0 %2180, %v1831
        %v2182 = vpop.permute.xlu0 %2181
        %2184 = vset.pattern.permute.xlu0 2
        %2185 = vperm.xlu0 %2184, %v1832
        %v2186 = vpop.permute.xlu0 %2185
        %2188 = vset.pattern.permute.xlu0 2
        %2189 = vperm.xlu0 %2188, %v1833
        %v2190 = vpop.permute.xlu0 %2189
        %2192 = vset.pattern.permute.xlu0 2
        %2193 = vperm.xlu0 %2192, %v1834
        %v2194 = vpop.permute.xlu0 %2193
        %2196 = vset.pattern.permute.xlu0 2
        %2197 = vperm.xlu0 %2196, %v1835
        %v2198 = vpop.permute.xlu0 %2197
        %2200 = vset.pattern.permute.xlu0 2
        %2201 = vperm.xlu0 %2200, %v1836
        %v2202 = vpop.permute.xlu0 %2201
        %2204 = vset.pattern.permute.xlu0 2
        %2205 = vperm.xlu0 %2204, %v1837
        %v2206 = vpop.permute.xlu0 %2205
        %2208 = vset.pattern.permute.xlu0 2
        %2209 = vperm.xlu0 %2208, %v1838
        %v2210 = vpop.permute.xlu0 %2209
        %2212 = vset.pattern.permute.xlu0 2
        %2213 = vperm.xlu0 %2212, %v1839
        %v2214 = vpop.permute.xlu0 %2213
        %2216 = vset.pattern.permute.xlu0 2
        %2217 = vperm.xlu0 %2216, %v1840
        %v2218 = vpop.permute.xlu0 %2217
        %2220 = vset.pattern.permute.xlu0 2
        %2221 = vperm.xlu0 %2220, %v1841
        %v2222 = vpop.permute.xlu0 %2221
        %2224 = vset.pattern.permute.xlu0 2
        %2225 = vperm.xlu0 %2224, %v1842
        %v2226 = vpop.permute.xlu0 %2225
        %v2228 = vlaneseq
        %v2229 = vshrl.u32 %v2228, 7
        %v2230 = vsub.s32 2, %v2229
        %v2231 = vrot.slane %v1790, %v2230
        %v2232 = vmul.f32 %v2166, %v2231
        %v2233 = vmul.f32 %v2170, %v2231
        %v2234 = vmul.f32 %v2174, %v2231
        %v2235 = vmul.f32 %v2178, %v2231
        %v2236 = vmul.f32 %v2182, %v2231
        %v2237 = vmul.f32 %v2186, %v2231
        %v2238 = vmul.f32 %v2190, %v2231
        %v2239 = vmul.f32 %v2194, %v2231
        %v2240 = vmul.f32 %v2198, %v2231
        %v2241 = vmul.f32 %v2202, %v2231
        %v2242 = vmul.f32 %v2206, %v2231
        %v2243 = vmul.f32 %v2210, %v2231
        %v2244 = vmul.f32 %v2214, %v2231
        %v2245 = vmul.f32 %v2218, %v2231
        %v2246 = vmul.f32 %v2222, %v2231
        %v2247 = vmul.f32 %v2226, %v2231
        %v2248 = vadd.f32 %v2148, %v2232
        %v2249 = vadd.f32 %v2149, %v2233
        %v2250 = vadd.f32 %v2150, %v2234
        %v2251 = vadd.f32 %v2151, %v2235
        %v2252 = vadd.f32 %v2152, %v2236
        %v2253 = vadd.f32 %v2153, %v2237
        %v2254 = vadd.f32 %v2154, %v2238
        %v2255 = vadd.f32 %v2155, %v2239
        %v2256 = vadd.f32 %v2156, %v2240
        %v2257 = vadd.f32 %v2157, %v2241
        %v2258 = vadd.f32 %v2158, %v2242
        %v2259 = vadd.f32 %v2159, %v2243
        %v2260 = vadd.f32 %v2160, %v2244
        %v2261 = vadd.f32 %v2161, %v2245
        %v2262 = vadd.f32 %v2162, %v2246
        %v2263 = vadd.f32 %v2163, %v2247
        %v2264 = vld [vmem:[%s479] sm:$0xff]
        %v2265 = vld [vmem:[%s479 + $0x8] sm:$0xff]
        %v2266 = vld [vmem:[%s479 + $0x10] sm:$0xff]
        %v2267 = vld [vmem:[%s479 + $0x18] sm:$0xff]
        %v2268 = vld [vmem:[%s479 + $0x20] sm:$0xff]
        %v2269 = vld [vmem:[%s479 + $0x28] sm:$0xff]
        %v2270 = vld [vmem:[%s479 + $0x30] sm:$0xff]
        %v2271 = vld [vmem:[%s479 + $0x38] sm:$0xff]
        %v2272 = vld [vmem:[%s479 + $0x40] sm:$0xff]
        %v2273 = vld [vmem:[%s479 + $0x48] sm:$0xff]
        %v2274 = vld [vmem:[%s479 + $0x50] sm:$0xff]
        %v2275 = vld [vmem:[%s479 + $0x58] sm:$0xff]
        %v2276 = vld [vmem:[%s479 + $0x60] sm:$0xff]
        %v2277 = vld [vmem:[%s479 + $0x68] sm:$0xff]
        %v2278 = vld [vmem:[%s479 + $0x70] sm:$0xff]
        %v2279 = vld [vmem:[%s479 + $0x78] sm:$0xff]
        %2281 = vset.pattern.permute.xlu0 0
        %2282 = vperm.xlu0 %2281, %v2264
        %v2283 = vpop.permute.xlu0 %2282
        %2286 = vset.pattern.permute.xlu0 0
        %2287 = vperm.xlu0 %2286, %v2265
        %v2288 = vpop.permute.xlu0 %2287
        %2291 = vset.pattern.permute.xlu0 0
        %2292 = vperm.xlu0 %2291, %v2266
        %v2293 = vpop.permute.xlu0 %2292
        %2296 = vset.pattern.permute.xlu0 0
        %2297 = vperm.xlu0 %2296, %v2267
        %v2298 = vpop.permute.xlu0 %2297
        %2301 = vset.pattern.permute.xlu0 0
        %2302 = vperm.xlu0 %2301, %v2268
        %v2303 = vpop.permute.xlu0 %2302
        %2306 = vset.pattern.permute.xlu0 0
        %2307 = vperm.xlu0 %2306, %v2269
        %v2308 = vpop.permute.xlu0 %2307
        %2311 = vset.pattern.permute.xlu0 0
        %2312 = vperm.xlu0 %2311, %v2270
        %v2313 = vpop.permute.xlu0 %2312
        %2316 = vset.pattern.permute.xlu0 0
        %2317 = vperm.xlu0 %2316, %v2271
        %v2318 = vpop.permute.xlu0 %2317
        %2321 = vset.pattern.permute.xlu0 0
        %2322 = vperm.xlu0 %2321, %v2272
        %v2323 = vpop.permute.xlu0 %2322
        %2326 = vset.pattern.permute.xlu0 0
        %2327 = vperm.xlu0 %2326, %v2273
        %v2328 = vpop.permute.xlu0 %2327
        %2331 = vset.pattern.permute.xlu0 0
        %2332 = vperm.xlu0 %2331, %v2274
        %v2333 = vpop.permute.xlu0 %2332
        %2336 = vset.pattern.permute.xlu0 0
        %2337 = vperm.xlu0 %2336, %v2275
        %v2338 = vpop.permute.xlu0 %2337
        %2341 = vset.pattern.permute.xlu0 0
        %2342 = vperm.xlu0 %2341, %v2276
        %v2343 = vpop.permute.xlu0 %2342
        %2346 = vset.pattern.permute.xlu0 0
        %2347 = vperm.xlu0 %2346, %v2277
        %v2348 = vpop.permute.xlu0 %2347
        %2351 = vset.pattern.permute.xlu0 0
        %2352 = vperm.xlu0 %2351, %v2278
        %v2353 = vpop.permute.xlu0 %2352
        %2356 = vset.pattern.permute.xlu0 0
        %2357 = vperm.xlu0 %2356, %v2279
        %v2358 = vpop.permute.xlu0 %2357
        %v2360 = vlaneseq
        %v2361 = vshrl.u32 %v2360, 7
        %v2362 = vsub.s32 0, %v2361
        %v2363 = vrot.slane %v1791, %v2362
        %v2364 = vmul.f32 %v2283, %v2363
        %v2365 = vmul.f32 %v2288, %v2363
        %v2366 = vmul.f32 %v2293, %v2363
        %v2367 = vmul.f32 %v2298, %v2363
        %v2368 = vmul.f32 %v2303, %v2363
        %v2369 = vmul.f32 %v2308, %v2363
        %v2370 = vmul.f32 %v2313, %v2363
        %v2371 = vmul.f32 %v2318, %v2363
        %v2372 = vmul.f32 %v2323, %v2363
        %v2373 = vmul.f32 %v2328, %v2363
        %v2374 = vmul.f32 %v2333, %v2363
        %v2375 = vmul.f32 %v2338, %v2363
        %v2376 = vmul.f32 %v2343, %v2363
        %v2377 = vmul.f32 %v2348, %v2363
        %v2378 = vmul.f32 %v2353, %v2363
        %v2379 = vmul.f32 %v2358, %v2363
        %v2380 = vadd.f32 %v2248, %v2364
        %v2381 = vadd.f32 %v2249, %v2365
        %v2382 = vadd.f32 %v2250, %v2366
        %v2383 = vadd.f32 %v2251, %v2367
        %v2384 = vadd.f32 %v2252, %v2368
        %v2385 = vadd.f32 %v2253, %v2369
        %v2386 = vadd.f32 %v2254, %v2370
        %v2387 = vadd.f32 %v2255, %v2371
        %v2388 = vadd.f32 %v2256, %v2372
        %v2389 = vadd.f32 %v2257, %v2373
        %v2390 = vadd.f32 %v2258, %v2374
        %v2391 = vadd.f32 %v2259, %v2375
        %v2392 = vadd.f32 %v2260, %v2376
        %v2393 = vadd.f32 %v2261, %v2377
        %v2394 = vadd.f32 %v2262, %v2378
        %v2395 = vadd.f32 %v2263, %v2379
        %v2396 = vlaneseq
        %v2397 = vshrl.u32 %v2396, 7
        %v2398 = vsub.s32 0, %v2397
        %v2399 = vrot.slane %v1792, %v2398
        %v2400 = vadd.f32 %v2380, %v2399
        %v2401 = vadd.f32 %v2381, %v2399
        %v2402 = vadd.f32 %v2382, %v2399
        %v2403 = vadd.f32 %v2383, %v2399
        %v2404 = vadd.f32 %v2384, %v2399
        %v2405 = vadd.f32 %v2385, %v2399
        %v2406 = vadd.f32 %v2386, %v2399
        %v2407 = vadd.f32 %v2387, %v2399
        %v2408 = vadd.f32 %v2388, %v2399
        %v2409 = vadd.f32 %v2389, %v2399
        %v2410 = vadd.f32 %v2390, %v2399
        %v2411 = vadd.f32 %v2391, %v2399
        %v2412 = vadd.f32 %v2392, %v2399
        %v2413 = vadd.f32 %v2393, %v2399
        %v2414 = vadd.f32 %v2394, %v2399
        %v2415 = vadd.f32 %v2395, %v2399
        %v2416 = vmax.f32 %v2400, 0.0
        %v2417 = vmax.f32 %v2401, 0.0
        %v2418 = vmax.f32 %v2402, 0.0
        %v2419 = vmax.f32 %v2403, 0.0
        %v2420 = vmax.f32 %v2404, 0.0
        %v2421 = vmax.f32 %v2405, 0.0
        %v2422 = vmax.f32 %v2406, 0.0
        %v2423 = vmax.f32 %v2407, 0.0
        %v2424 = vmax.f32 %v2408, 0.0
        %v2425 = vmax.f32 %v2409, 0.0
        %v2426 = vmax.f32 %v2410, 0.0
        %v2427 = vmax.f32 %v2411, 0.0
        %v2428 = vmax.f32 %v2412, 0.0
        %v2429 = vmax.f32 %v2413, 0.0
        %v2430 = vmax.f32 %v2414, 0.0
        %v2431 = vmax.f32 %v2415, 0.0
        %v2432 = vpack.c.bf16 %v2417, %v2416
        %v2433 = vpack.c.bf16 %v2419, %v2418
        %v2434 = vpack.c.bf16 %v2421, %v2420
        %v2435 = vpack.c.bf16 %v2423, %v2422
        %v2436 = vpack.c.bf16 %v2425, %v2424
        %v2437 = vpack.c.bf16 %v2427, %v2426
        %v2438 = vpack.c.bf16 %v2429, %v2428
        %v2439 = vpack.c.bf16 %v2431, %v2430
        %v2440 = vlaneseq
        %v2441 = vshrl.u32 %v2440, 7
        %v2442 = vsub.s32 0, %v2441
        %v2443 = vrot.slane %v1805, %v2442
        %v2445 = vsel %vm1156, %v2432, 0
        %v2448 = vsel %vm1156, %v2433, 0
        %v2451 = vsel %vm1156, %v2434, 0
        %v2454 = vsel %vm1156, %v2435, 0
        %v2457 = vsel %vm1156, %v2436, 0
        %v2460 = vsel %vm1156, %v2437, 0
        %v2463 = vsel %vm1156, %v2438, 0
        %v2466 = vsel %vm1156, %v2439, 0
        %2468 = vmatprep.subr.bf16.mxu0 0
        %2469 = vmatpush1.bf16.msra.mxu0 %v1801
        %2470 = vmatprep.subr.bf16.mxu0 0
        %2471 = vmatpush1.bf16.msra.mxu0 %v1802
        %2472 = vmatprep.subr.bf16.mxu0 0
        %2473 = vmatpush1.bf16.msra.mxu0 %v1803
        %2474 = vmatprep.subr.bf16.mxu0 0
        %2475 = vmatpush1.bf16.msra.mxu0 %v1804
        %2476 = vmatprep.subr.bf16.mxu0 0
        %2477 = vmatpush1.bf16.msra.mxu0 0
        %2478 = vmatprep.subr.bf16.mxu0 0
        %2479 = vmatpush1.bf16.msra.mxu0 0
        %2480 = vmatprep.subr.bf16.mxu0 0
        %2481 = vmatpush1.bf16.msra.mxu0 0
        %2482 = vmatprep.subr.bf16.mxu0 0
        %2483 = vmatpush1.bf16.msra.mxu0 0
        %2484 = vmatprep.subr.bf16.mxu0 0
        %2485 = vmatpush1.bf16.msra.mxu0 0
        %2486 = vmatprep.subr.bf16.mxu0 0
        %2487 = vmatpush1.bf16.msra.mxu0 0
        %2488 = vmatprep.subr.bf16.mxu0 0
        %2489 = vmatpush1.bf16.msra.mxu0 0
        %2490 = vmatprep.subr.bf16.mxu0 0
        %2491 = vmatpush1.bf16.msra.mxu0 0
        %2492 = vmatprep.subr.bf16.mxu0 0
        %2493 = vmatpush1.bf16.msra.mxu0 0
        %2494 = vmatprep.subr.bf16.mxu0 0
        %2495 = vmatpush1.bf16.msra.mxu0 0
        %2496 = vmatprep.subr.bf16.mxu0 0
        %2497 = vmatpush1.bf16.msra.mxu0 0
        %2498 = vmatprep.subr.bf16.mxu0 0
        %2499 = vmatpush1.bf16.msra.mxu0 0
        %2500 = vmatprep.mubr.bf16.mxu0 0
        %2501 = vmatmul.mubr.bf16.gmra.mrb[0].mxu0 %v2445
        %v2502 = vpop.f32.mrb[0].mxu0
        %v2503 = vadd.f32 %v2443, %v2502
        %v2504 = vpop.f32.mrb[0].mxu0
        %v2505 = vpop.f32.mrb[0].mxu0
        %v2506 = vadd.f32 %v2443, %v2505
        %v2507 = vpop.f32.mrb[0].mxu0
        %2508 = vmatprep.mubr.bf16.mxu0 0
        %2509 = vmatmul.mubr.bf16.gmra.mrb[0].mxu0 %v2448
        %v2510 = vpop.f32.mrb[0].mxu0
        %v2511 = vadd.f32 %v2443, %v2510
        %v2512 = vpop.f32.mrb[0].mxu0
        %v2513 = vpop.f32.mrb[0].mxu0
        %v2514 = vadd.f32 %v2443, %v2513
        %v2515 = vpop.f32.mrb[0].mxu0
        %2516 = vmatprep.mubr.bf16.mxu0 0
        %2517 = vmatmul.mubr.bf16.gmra.mrb[0].mxu0 %v2451
        %v2518 = vpop.f32.mrb[0].mxu0
        %v2519 = vadd.f32 %v2443, %v2518
        %v2520 = vpop.f32.mrb[0].mxu0
        %v2521 = vpop.f32.mrb[0].mxu0
        %v2522 = vadd.f32 %v2443, %v2521
        %v2523 = vpop.f32.mrb[0].mxu0
        %2524 = vmatprep.mubr.bf16.mxu0 0
        %2525 = vmatmul.mubr.bf16.gmra.mrb[0].mxu0 %v2454
        %v2526 = vpop.f32.mrb[0].mxu0
        %v2527 = vadd.f32 %v2443, %v2526
        %v2528 = vpop.f32.mrb[0].mxu0
        %v2529 = vpop.f32.mrb[0].mxu0
        %v2530 = vadd.f32 %v2443, %v2529
        %v2531 = vpop.f32.mrb[0].mxu0
        %2532 = vmatprep.mubr.bf16.mxu0 0
        %2533 = vmatmul.mubr.bf16.gmra.mrb[0].mxu0 %v2457
        %v2534 = vpop.f32.mrb[0].mxu0
        %v2535 = vadd.f32 %v2443, %v2534
        %v2536 = vpop.f32.mrb[0].mxu0
        %v2537 = vpop.f32.mrb[0].mxu0
        %v2538 = vadd.f32 %v2443, %v2537
        %v2539 = vpop.f32.mrb[0].mxu0
        %2540 = vmatprep.mubr.bf16.mxu0 0
        %2541 = vmatmul.mubr.bf16.gmra.mrb[0].mxu0 %v2460
        %v2542 = vpop.f32.mrb[0].mxu0
        %v2543 = vadd.f32 %v2443, %v2542
        %v2544 = vpop.f32.mrb[0].mxu0
        %v2545 = vpop.f32.mrb[0].mxu0
        %v2546 = vadd.f32 %v2443, %v2545
        %v2547 = vpop.f32.mrb[0].mxu0
        %2548 = vmatprep.mubr.bf16.mxu0 0
        %2549 = vmatmul.mubr.bf16.gmra.mrb[0].mxu0 %v2463
        %v2550 = vpop.f32.mrb[0].mxu0
        %v2551 = vadd.f32 %v2443, %v2550
        %v2552 = vpop.f32.mrb[0].mxu0
        %v2553 = vpop.f32.mrb[0].mxu0
        %v2554 = vadd.f32 %v2443, %v2553
        %v2555 = vpop.f32.mrb[0].mxu0
        %2556 = vmatprep.mubr.bf16.mxu0 0
        %2557 = vmatmul.mubr.bf16.gmra.mrb[0].mxu0 %v2466
        %v2558 = vpop.f32.mrb[0].mxu0
        %v2559 = vadd.f32 %v2443, %v2558
        %v2560 = vpop.f32.mrb[0].mxu0
        %v2561 = vpop.f32.mrb[0].mxu0
        %v2562 = vadd.f32 %v2443, %v2561
        %v2563 = vpop.f32.mrb[0].mxu0
        %2564 = vdwg.mxu0
        %v2565 = vmax.f32 %v2503, 0.0
        %v2566 = vmax.f32 %v2506, 0.0
        %v2567 = vmax.f32 %v2511, 0.0
        %v2568 = vmax.f32 %v2514, 0.0
        %v2569 = vmax.f32 %v2519, 0.0
        %v2570 = vmax.f32 %v2522, 0.0
        %v2571 = vmax.f32 %v2527, 0.0
        %v2572 = vmax.f32 %v2530, 0.0
        %v2573 = vmax.f32 %v2535, 0.0
        %v2574 = vmax.f32 %v2538, 0.0
        %v2575 = vmax.f32 %v2543, 0.0
        %v2576 = vmax.f32 %v2546, 0.0
        %v2577 = vmax.f32 %v2551, 0.0
        %v2578 = vmax.f32 %v2554, 0.0
        %v2579 = vmax.f32 %v2559, 0.0
        %v2580 = vmax.f32 %v2562, 0.0
        %v2581 = vpack.c.bf16 %v2566, %v2565
        %v2582 = vpack.c.bf16 %v2568, %v2567
        %v2583 = vpack.c.bf16 %v2570, %v2569
        %v2584 = vpack.c.bf16 %v2572, %v2571
        %v2585 = vpack.c.bf16 %v2574, %v2573
        %v2586 = vpack.c.bf16 %v2576, %v2575
        %v2587 = vpack.c.bf16 %v2578, %v2577
        %v2588 = vpack.c.bf16 %v2580, %v2579
        %v2589 = vlaneseq
        %v2590 = vshrl.u32 %v2589, 7
        %v2591 = vsub.s32 0, %v2590
        %v2592 = vrot.slane %v1818, %v2591
        %v2594 = vsel %vm1156, %v2581, 0
        %v2597 = vsel %vm1156, %v2582, 0
        %v2600 = vsel %vm1156, %v2583, 0
        %v2603 = vsel %vm1156, %v2584, 0
        %v2606 = vsel %vm1156, %v2585, 0
        %v2609 = vsel %vm1156, %v2586, 0
        %v2612 = vsel %vm1156, %v2587, 0
        %v2615 = vsel %vm1156, %v2588, 0
        %2617 = vmatprep.subr.bf16.mxu0 0
        %2618 = vmatpush1.bf16.msra.mxu0 %v1814
        %2619 = vmatprep.subr.bf16.mxu0 0
        %2620 = vmatpush1.bf16.msra.mxu0 %v1815
        %2621 = vmatprep.subr.bf16.mxu0 0
        %2622 = vmatpush1.bf16.msra.mxu0 %v1816
        %2623 = vmatprep.subr.bf16.mxu0 0
        %2624 = vmatpush1.bf16.msra.mxu0 %v1817
        %2625 = vmatprep.subr.bf16.mxu0 0
        %2626 = vmatpush1.bf16.msra.mxu0 0
        %2627 = vmatprep.subr.bf16.mxu0 0
        %2628 = vmatpush1.bf16.msra.mxu0 0
        %2629 = vmatprep.subr.bf16.mxu0 0
        %2630 = vmatpush1.bf16.msra.mxu0 0
        %2631 = vmatprep.subr.bf16.mxu0 0
        %2632 = vmatpush1.bf16.msra.mxu0 0
        %2633 = vmatprep.subr.bf16.mxu0 0
        %2634 = vmatpush1.bf16.msra.mxu0 0
        %2635 = vmatprep.subr.bf16.mxu0 0
        %2636 = vmatpush1.bf16.msra.mxu0 0
        %2637 = vmatprep.subr.bf16.mxu0 0
        %2638 = vmatpush1.bf16.msra.mxu0 0
        %2639 = vmatprep.subr.bf16.mxu0 0
        %2640 = vmatpush1.bf16.msra.mxu0 0
        %2641 = vmatprep.subr.bf16.mxu0 0
        %2642 = vmatpush1.bf16.msra.mxu0 0
        %2643 = vmatprep.subr.bf16.mxu0 0
        %2644 = vmatpush1.bf16.msra.mxu0 0
        %2645 = vmatprep.subr.bf16.mxu0 0
        %2646 = vmatpush1.bf16.msra.mxu0 0
        %2647 = vmatprep.subr.bf16.mxu0 0
        %2648 = vmatpush1.bf16.msra.mxu0 0
        %2649 = vmatprep.mubr.bf16.mxu0 0
        %2650 = vmatmul.mubr.bf16.gmra.mrb[0].mxu0 %v2594
        %v2651 = vpop.f32.mrb[0].mxu0
        %v2652 = vadd.f32 %v2592, %v2651
        %v2653 = vpop.f32.mrb[0].mxu0
        %v2654 = vpop.f32.mrb[0].mxu0
        %v2655 = vadd.f32 %v2592, %v2654
        %v2656 = vpop.f32.mrb[0].mxu0
        %2657 = vmatprep.mubr.bf16.mxu0 0
        %2658 = vmatmul.mubr.bf16.gmra.mrb[0].mxu0 %v2597
        %v2659 = vpop.f32.mrb[0].mxu0
        %v2660 = vadd.f32 %v2592, %v2659
        %v2661 = vpop.f32.mrb[0].mxu0
        %v2662 = vpop.f32.mrb[0].mxu0
        %v2663 = vadd.f32 %v2592, %v2662
        %v2664 = vpop.f32.mrb[0].mxu0
        %2665 = vmatprep.mubr.bf16.mxu0 0
        %2666 = vmatmul.mubr.bf16.gmra.mrb[0].mxu0 %v2600
        %v2667 = vpop.f32.mrb[0].mxu0
        %v2668 = vadd.f32 %v2592, %v2667
        %v2669 = vpop.f32.mrb[0].mxu0
        %v2670 = vpop.f32.mrb[0].mxu0
        %v2671 = vadd.f32 %v2592, %v2670
        %v2672 = vpop.f32.mrb[0].mxu0
        %2673 = vmatprep.mubr.bf16.mxu0 0
        %2674 = vmatmul.mubr.bf16.gmra.mrb[0].mxu0 %v2603
        %v2675 = vpop.f32.mrb[0].mxu0
        %v2676 = vadd.f32 %v2592, %v2675
        %v2677 = vpop.f32.mrb[0].mxu0
        %v2678 = vpop.f32.mrb[0].mxu0
        %v2679 = vadd.f32 %v2592, %v2678
        %v2680 = vpop.f32.mrb[0].mxu0
        %2681 = vmatprep.mubr.bf16.mxu0 0
        %2682 = vmatmul.mubr.bf16.gmra.mrb[0].mxu0 %v2606
        %v2683 = vpop.f32.mrb[0].mxu0
        %v2684 = vadd.f32 %v2592, %v2683
        %v2685 = vpop.f32.mrb[0].mxu0
        %v2686 = vpop.f32.mrb[0].mxu0
        %v2687 = vadd.f32 %v2592, %v2686
        %v2688 = vpop.f32.mrb[0].mxu0
        %2689 = vmatprep.mubr.bf16.mxu0 0
        %2690 = vmatmul.mubr.bf16.gmra.mrb[0].mxu0 %v2609
        %v2691 = vpop.f32.mrb[0].mxu0
        %v2692 = vadd.f32 %v2592, %v2691
        %v2693 = vpop.f32.mrb[0].mxu0
        %v2694 = vpop.f32.mrb[0].mxu0
        %v2695 = vadd.f32 %v2592, %v2694
        %v2696 = vpop.f32.mrb[0].mxu0
        %2697 = vmatprep.mubr.bf16.mxu0 0
        %2698 = vmatmul.mubr.bf16.gmra.mrb[0].mxu0 %v2612
        %v2699 = vpop.f32.mrb[0].mxu0
        %v2700 = vadd.f32 %v2592, %v2699
        %v2701 = vpop.f32.mrb[0].mxu0
        %v2702 = vpop.f32.mrb[0].mxu0
        %v2703 = vadd.f32 %v2592, %v2702
        %v2704 = vpop.f32.mrb[0].mxu0
        %2705 = vmatprep.mubr.bf16.mxu0 0
        %2706 = vmatmul.mubr.bf16.gmra.mrb[0].mxu0 %v2615
        %v2707 = vpop.f32.mrb[0].mxu0
        %v2708 = vadd.f32 %v2592, %v2707
        %v2709 = vpop.f32.mrb[0].mxu0
        %v2710 = vpop.f32.mrb[0].mxu0
        %v2711 = vadd.f32 %v2592, %v2710
        %v2712 = vpop.f32.mrb[0].mxu0
        %2713 = vdwg.mxu0
        %2714 = vst [vmem:[%s485] sm:$0xff] %v2652
        %2715 = vst [vmem:[%s485 + $0x8] sm:$0xff] %v2655
        %2716 = vst [vmem:[%s485 + $0x10] sm:$0xff] %v2660
        %2717 = vst [vmem:[%s485 + $0x18] sm:$0xff] %v2663
        %2718 = vst [vmem:[%s485 + $0x20] sm:$0xff] %v2668
        %2719 = vst [vmem:[%s485 + $0x28] sm:$0xff] %v2671
        %2720 = vst [vmem:[%s485 + $0x30] sm:$0xff] %v2676
        %2721 = vst [vmem:[%s485 + $0x38] sm:$0xff] %v2679
        %2722 = vst [vmem:[%s485 + $0x40] sm:$0xff] %v2684
        %2723 = vst [vmem:[%s485 + $0x48] sm:$0xff] %v2687
        %2724 = vst [vmem:[%s485 + $0x50] sm:$0xff] %v2692
        %2725 = vst [vmem:[%s485 + $0x58] sm:$0xff] %v2695
        %2726 = vst [vmem:[%s485 + $0x60] sm:$0xff] %v2700
        %2727 = vst [vmem:[%s485 + $0x68] sm:$0xff] %v2703
        %2728 = vst [vmem:[%s485 + $0x70] sm:$0xff] %v2708
        %2729 = vst [vmem:[%s485 + $0x78] sm:$0xff] %v2711
        %s2730 = smul.u32 16, %s22
        %p2731 = scmp.lt.s32.totalorder %s2730, 31
        %s2732 = scalar_select %p2731, %s2730, 31
        %s2733 = smul.addr %s2732, 8
        %s2734 = scalar_lea.vmem %s10, %s2733
        // Predicated region
        $region65: #{conftree_forward.1} parent=59 // pred_check
          %p2735 = pneg %p280
        $region66: #{conftree_forward.1} parent=59 // pred_check_branch
          %2737 = sbr.rel (%p2735) target = $region68
        $region67: #{conftree_forward.1} parent=59 // pred_region
          %s2738 = smul.u32 16, %s22
        $region68: #{conftree_forward.1} parent=59 // pred_fallthru
          _
      $region60: #{conftree_forward.1} parent=5 // pred_fallthru
        _
      %p2739 = scmp.le.s32.totalorder 2, %s17
      // Predicated region
      $region69: #{conftree_forward.1} parent=5 // pred_check
        %p2740 = pneg %p2739
      $region70: #{conftree_forward.1} parent=5 // pred_check_branch
        %2742 = sbr.rel (%p2740) target = $region72
      $region71: #{conftree_forward.1} parent=5 // pred_region
        %s2743 = ssub.s32 %s17, 2
        // Predicated region
        $region73: #{conftree_forward.1} parent=71 // pred_check
          %p2744 = pneg %p286
        $region74: #{conftree_forward.1} parent=71 // pred_check_branch
          %2746 = sbr.rel (%p2744) target = $region76
        $region75: #{conftree_forward.1} parent=71 // pred_region
          %s2747 = smul.u32 16, %s23
          %p2748 = scmp.lt.s32.totalorder %s2747, 31
          %s2749 = scalar_select %p2748, %s2747, 31
          %s2750 = smul.addr %s2749, 8
          %s2751 = scalar_lea.vmem %s10, %s2750
        $region76: #{conftree_forward.1} parent=71 // pred_fallthru
          _
      $region72: #{conftree_forward.1} parent=5 // pred_fallthru
        _
    $region6: #{conftree_forward.1} parent=1 // loop_footer
      %s21 = sadd.s32 1, %s17
    $region7: #{conftree_forward.1} parent=1 // loop_footer_branch
      %16 = sbr.rel target = $region3
    $region8: #{conftree_forward.1} parent=1 // loop_exit
      _
    %2752 = vsyncpa [#allocation3], 1
    %s2753 = scalar_lea.sflag [#allocation3], 1
    %2754 = vsyncpa %s2753, 1

</llo_original>
